<compile_context>
chip_gen: v6e
topology: v6e:2x2x1
jax: 0.10.0
libtpu: 0.0.40
codegen_flags: <defaults>
</compile_context>

<pallas_src>
import numpy as np
import jax
import jax.numpy as jnp
from jax import lax
from jax.experimental import pallas as pl
from jax.experimental.pallas import tpu as pltpu


def _round_up(x, m):
    return ((x + m - 1) // m) * m


# ----------------------------------------------------------------------------
# Pallas kernel: one grid step == one batch element of one scale.
# ----------------------------------------------------------------------------
def _loss_stats_kernel(pred_ref, gt_ref, out_ref):
    """pred_ref : (h_pad, w_pad) f32 prediction (zeros in the padding).
    gt_ref   : (h_pad, w_pad) f32 resized gt, NaN where invalid and NaN in the
               >=1 padding row / column (so res == 0 there).
    out_ref  : (1, 8, 128) f32; lanes 0..3 hold
               [n_valid, sum(res), sum(res^2), sum_mask(|gx|+|gy|)].
    """
    pred = pred_ref[...]
    gt = gt_ref[...]
    H, W = pred.shape

    valid = jnp.logical_not(jnp.isnan(gt))
    res = jnp.where(valid, pred - gt, jnp.float32(0.0))

    n = jnp.sum(valid.astype(jnp.float32))
    s1 = jnp.sum(res)
    s2 = jnp.sum(res * res)

    # 3x3 Sobel of res with zero padding, built purely from XLU rolls.  No
    # edge masks: every wrap lands in / pulls from the zero-residual padding
    # row/column, which reproduces F.conv2d(padding=1)'s zero pad; the padded
    # (invalid) lanes never enter the masked sum below.
    # (If a bundle dump ever shows the 2 XLUs as the binding slot, the four
    #  sublane rolls can become +/-1-row shifted loads from a VMEM scratch.)
    a = pltpu.roll(res, shift=1, axis=1)        # res(y, x-1)
    b = pltpu.roll(res, shift=W - 1, axis=1)    # res(y, x+1)
    d = a - b                                   # sobelX row [1, 0, -1]
    s = a + 2.0 * res + b                       # sobelY row [1, 2,  1]
    gx = pltpu.roll(d, shift=1, axis=0) + 2.0 * d + pltpu.roll(d, shift=H - 1, axis=0)
    gy = pltpu.roll(s, shift=1, axis=0) - pltpu.roll(s, shift=H - 1, axis=0)
    sg = jnp.sum(jnp.where(valid, jnp.abs(gx) + jnp.abs(gy), jnp.float32(0.0)))

    lane = lax.broadcasted_iota(jnp.int32, (8, 128), 1)
    zero = jnp.float32(0.0)
    stats = (jnp.where(lane == 0, n, zero)
             + jnp.where(lane == 1, s1, zero)
             + jnp.where(lane == 2, s2, zero)
             + jnp.where(lane == 3, sg, zero))
    out_ref[0, :, :] = stats


def _scale_stats(pred_padded, gt_padded):
    """One pallas_call for one scale: grid over the batch, per-step stats tile."""
    n, h_pad, w_pad = (int(d) for d in pred_padded.shape)
    return pl.pallas_call(
        _loss_stats_kernel,
        out_shape=jax.ShapeDtypeStruct((n, 8, 128), jnp.float32),
        grid_spec=pltpu.PrefetchScalarGridSpec(
            num_scalar_prefetch=0,
            grid=(n,),
            in_specs=[
                pl.BlockSpec((pl.Squeezed(), h_pad, w_pad), lambda i: (i, 0, 0)),
                pl.BlockSpec((pl.Squeezed(), h_pad, w_pad), lambda i: (i, 0, 0)),
            ],
            out_specs=pl.BlockSpec((1, 8, 128), lambda i: (i, 0, 0)),
        ),
        compiler_params=pltpu.CompilerParams(
            dimension_semantics=("parallel",)),
    )(pred_padded, gt_padded)


# ----------------------------------------------------------------------------
# PyTorch-exact bilinear resize via static interpolation matrices.
# ----------------------------------------------------------------------------
def _bilinear_matrices(out_size, in_size, out_pad, in_pad):
    """Interpolation-weight and 0/1 touched-neighbour matrices for
    F.interpolate(mode='bilinear', align_corners=False), padded to
    (out_pad, in_pad).  Padded output rows point at the NaN padding row of
    the NaN-padded input so they come out invalid (=> res = 0 in padding).
    Built with numpy at trace time (compile-time constants)."""
    wmat = np.zeros((out_pad, in_pad), np.float32)
    tmat = np.zeros((out_pad, in_pad), np.float32)
    o = np.arange(out_size)
    if out_size == in_size:
        wmat[o, o] = 1.0
        tmat[o, o] = 1.0
    else:
        scale = in_size / out_size
        src = np.maximum((o + 0.5) * scale - 0.5, 0.0)
        i0 = np.minimum(np.floor(src).astype(np.int64), in_size - 1)
        i1 = np.minimum(i0 + 1, in_size - 1)
        w1 = (src - i0).astype(np.float32)
        w0 = (1.0 - w1).astype(np.float32)
        np.add.at(wmat, (o, i0), w0)
        np.add.at(wmat, (o, i1), w1)
        tmat[o, i0] = 1.0
        tmat[o, i1] = 1.0
    # Padded output rows touch the (NaN) padding row/col of gt -> invalid.
    tmat[out_size:, in_size] = 1.0
    return wmat, tmat


# ----------------------------------------------------------------------------
# Total_Loss forward.
# ----------------------------------------------------------------------------
def total_loss_pallas(predicted, groundtruth, alpha=0.5,
                      scale_weights=(1.0, 1.0, 1.0, 1.0),
                      penalize_spikes=False, beta=1.0,
                      intermediary_spike_tensors=None):
    gt = groundtruth.astype(jnp.float32)[:, 0]                  # (N, Hg, Wg)
    batch, h_gt, w_gt = (int(d) for d in gt.shape)
    hp_gt = _round_up(h_gt + 1, 8)        # >=1 NaN pad row (invalid routing,
    wp_gt = _round_up(w_gt + 1, 128)      #  zero-res Sobel wrap), lane-dense.
    gt_pad = jnp.pad(gt, ((0, 0), (0, hp_gt - h_gt), (0, wp_gt - w_gt)),
                     constant_values=float('nan'))
    invalid = jnp.isnan(gt_pad)
    filled = jnp.where(invalid, jnp.float32(0.0), gt_pad)
    bad_src = invalid.astype(jnp.float32)

    si_total = jnp.float32(0.0)
    gm_total = jnp.float32(0.0)
    for w_s, pred in zip(scale_weights, predicted):
        h, w = int(pred.shape[2]), int(pred.shape[3])
        hp = _round_up(h + 1, 8)
        wp = _round_up(w + 1, 128)

        if (h, w) == (h_gt, w_gt):
            gt_r = gt_pad                          # identity scale: exact, free
        else:
            wy, ty = _bilinear_matrices(h, h_gt, hp, hp_gt)
            wx, tx = _bilinear_matrices(w, w_gt, wp, wp_gt)
            wy, ty, wx, tx = (jnp.asarray(m) for m in (wy, ty, wx, tx))
            # Value path must be f32-exact; touched path is exact 0/1 data at
            # default precision (no HIGHEST -> no multi-pass MXU emulation).
            val = jnp.einsum('oh,nhw,pw->nop', wy, filled, wx,
                             precision=lax.Precision.HIGHEST)
            bad = jnp.einsum('oh,nhw,pw->nop', ty, bad_src, tx)
            gt_r = jnp.where(bad > 0, jnp.float32(jnp.nan), val)

        pred_p = jnp.pad(pred[:, 0].astype(jnp.float32),
                         ((0, 0), (0, hp - h), (0, wp - w)))    # zeros in pad

        stats = _scale_stats(pred_p, gt_r)                      # (N, 8, 128)
        st = jnp.sum(stats[:, 0, :4], axis=0)                   # batch reduce
        cnt, s1, s2, sg = st[0], st[1], st[2], st[3]
        si_total = si_total + jnp.float32(w_s) * (s2 / cnt - (s1 * s1) / (cnt * cnt))
        gm_total = gm_total + jnp.float32(w_s) * (sg / cnt)

    loss = si_total + jnp.float32(alpha) * gm_total

    if penalize_spikes:
        # SpikePenalization_Loss: trivial reductions, done in plain JAX.
        sp = jnp.float32(0.0)
        for t in intermediary_spike_tensors:
            tf = t.astype(jnp.float32)
            sp = sp + jnp.sum(tf * tf) / jnp.float32(2.0 * tf.size)
        loss = loss + jnp.float32(beta) * sp
    return loss


# ----------------------------------------------------------------------------
# Pure-JAX reference (mirrors the PyTorch code, gather-based resize).
# ----------------------------------------------------------------------------
def _torch_bilinear_resize_gather(x, out_h, out_w):
    _, _, H, W = x.shape
    if (H, W) == (out_h, out_w):
        return x

    def src_idx(out_size, in_size):
        scale = in_size / out_size
        s = (jnp.arange(out_size, dtype=jnp.float32) + 0.5) * scale - 0.5
        s = jnp.maximum(s, 0.0)
        i0 = jnp.minimum(jnp.floor(s).astype(jnp.int32), in_size - 1)
        i1 = jnp.minimum(i0 + 1, in_size - 1)
        w1 = s - i0.astype(jnp.float32)
        w0 = 1.0 - w1
        return i0, i1, w0, w1

    y0, y1, wy0, wy1 = src_idx(out_h, H)
    x0, x1, wx0, wx1 = src_idx(out_w, W)

    def gather(yi, xi):
        return x[:, :, yi[:, None], xi[None, :]]

    return (wy0[:, None] * (wx0[None, :] * gather(y0, x0)
                            + wx1[None, :] * gather(y0, x1))
            + wy1[:, None] * (wx0[None, :] * gather(y1, x0)
                              + wx1[None, :] * gather(y1, x1)))


def _scale_invariant_loss_ref(pred, gt):
    mask = jnp.logical_not(jnp.isnan(gt))
    n = jnp.sum(mask).astype(jnp.float32)
    res = jnp.where(mask, pred - gt, 0.0)
    mse = jnp.sum(res * res) / n
    quad = (jnp.sum(res) ** 2) / (n * n)
    return mse - quad


def _gradient_matching_loss_ref(pred, gt):
    mask = jnp.logical_not(jnp.isnan(gt))
    n = jnp.sum(mask).astype(jnp.float32)
    res = jnp.where(mask, pred - gt, 0.0)
    H, W = res.shape[-2:]
    rp = jnp.pad(res[:, 0], ((0, 0), (1, 1), (1, 1)))

    def win(dy, dx):
        return rp[:, dy:dy + H, dx:dx + W]

    gx = (win(0, 0) - win(0, 2)) + 2 * (win(1, 0) - win(1, 2)) + (win(2, 0) - win(2, 2))
    gy = (win(0, 0) + 2 * win(0, 1) + win(0, 2)) - (win(2, 0) + 2 * win(2, 1) + win(2, 2))
    m = mask[:, 0]
    return jnp.sum(jnp.where(m, jnp.abs(gx) + jnp.abs(gy), 0.0)) / n


def total_loss_ref(predicted, groundtruth, alpha=0.5,
                   scale_weights=(1.0, 1.0, 1.0, 1.0)):
    si_total = 0.0
    gm_total = 0.0
    for w, pred in zip(scale_weights, predicted):
        _, _, H, W = pred.shape
        gt_r = _torch_bilinear_resize_gather(groundtruth, H, W)
        si_total = si_total + w * _scale_invariant_loss_ref(pred, gt_r)
        gm_total = gm_total + w * _gradient_matching_loss_ref(pred, gt_r)
    return si_total + alpha * gm_total


if __name__ == "__main__":
    key = jax.random.PRNGKey(0)
    N = 2
    sizes = [(16, 16), (8, 8), (4, 4), (2, 2)]
    keys = jax.random.split(key, len(sizes) + 1)
    predicted = tuple(
        jax.random.normal(k, (N, 1, h, w), jnp.float32)
        for k, (h, w) in zip(keys[:-1], sizes)
    )
    groundtruth = jax.random.normal(keys[-1], (N, 1, 16, 16), jnp.float32)
    # A few invalid (NaN) depth pixels to exercise the mask logic.
    groundtruth = (groundtruth
                   .at[0, 0, 3, 5].set(jnp.nan)
                   .at[0, 0, 9, 12].set(jnp.nan)
                   .at[1, 0, 10, 2].set(jnp.nan))

    loss_fn = jax.jit(lambda p, g: total_loss_pallas(
        p, g, alpha=0.5, scale_weights=(1.0, 1.0, 1.0, 1.0)))
    loss = jax.block_until_ready(loss_fn(predicted, groundtruth))

    ref = total_loss_ref(predicted, groundtruth,
                         alpha=0.5, scale_weights=(1.0, 1.0, 1.0, 1.0))
    np.testing.assert_allclose(np.array(loss), np.array(ref),
                               rtol=1e-4, atol=1e-5)
    print("KERNEL_OK")
</pallas_src>

<mosaic_0001>
module attributes {stable_mosaic.version = 11 : i64} {
  func.func @_loss_stats_kernel(%arg0: i32, %arg1: memref<1x24x128xf32, #tpu.memory_space<vmem>>, %arg2: memref<1x24x128xf32, #tpu.memory_space<vmem>>, %arg3: memref<1x8x128xf32, #tpu.memory_space<vmem>>) attributes {dimension_semantics = [#tpu.dimension_semantics<parallel>], iteration_bounds = array<i64: 2>, scalar_prefetch = 0 : i64, scratch_operands = 0 : i64, tpu.core_type = #tpu.core_type<tc>, window_params = [{transform_indices = @transform_0, window_bounds = array<i64: 1, 24, 128>}, {transform_indices = @transform_1, window_bounds = array<i64: 1, 24, 128>}, {transform_indices = @transform_2, window_bounds = array<i64: 1, 8, 128>}]} {
    %c0 = arith.constant 0 : index
    %c0_0 = arith.constant 0 : index
    %c0_1 = arith.constant 0 : index
    %0 = vector.load %arg1[%c0, %c0_0, %c0_1] : memref<1x24x128xf32, #tpu.memory_space<vmem>>, vector<1x24x128xf32>
    %1 = vector.shape_cast %0 : vector<1x24x128xf32> to vector<24x128xf32>
    %c0_2 = arith.constant 0 : index
    %c0_3 = arith.constant 0 : index
    %c0_4 = arith.constant 0 : index
    %2 = vector.load %arg2[%c0_2, %c0_3, %c0_4] : memref<1x24x128xf32, #tpu.memory_space<vmem>>, vector<1x24x128xf32>
    %3 = vector.shape_cast %2 : vector<1x24x128xf32> to vector<24x128xf32>
    %4 = arith.cmpf one, %3, %3 : vector<24x128xf32>
    %cst = arith.constant dense<true> : vector<24x128xi1>
    %5 = arith.xori %4, %cst : vector<24x128xi1>
    %6 = arith.subf %1, %3 : vector<24x128xf32>
    %cst_5 = arith.constant 0.000000e+00 : f32
    %7 = vector.broadcast %cst_5 : f32 to vector<24x128xf32>
    %8 = arith.select %5, %6, %7 : vector<24x128xi1>, vector<24x128xf32>
    %9 = arith.extui %5 : vector<24x128xi1> to vector<24x128xi32>
    %10 = arith.sitofp %9 : vector<24x128xi32> to vector<24x128xf32>
    %11 = vector.shape_cast %10 : vector<24x128xf32> to vector<1x24x128xf32>
    %cst_6 = arith.constant dense<0.000000e+00> : vector<1xf32>
    %12 = vector.multi_reduction <add>, %11, %cst_6 [1, 2] : vector<1x24x128xf32> to vector<1xf32>
    %13 = vector.shape_cast %12 : vector<1xf32> to vector<1x1x1xf32>
    %14 = vector.extract %13[0, 0, 0] : f32 from vector<1x1x1xf32>
    %15 = vector.shape_cast %8 : vector<24x128xf32> to vector<1x24x128xf32>
    %cst_7 = arith.constant dense<0.000000e+00> : vector<1xf32>
    %16 = vector.multi_reduction <add>, %15, %cst_7 [1, 2] : vector<1x24x128xf32> to vector<1xf32>
    %17 = vector.shape_cast %16 : vector<1xf32> to vector<1x1x1xf32>
    %18 = vector.extract %17[0, 0, 0] : f32 from vector<1x1x1xf32>
    %19 = arith.mulf %8, %8 : vector<24x128xf32>
    %20 = vector.shape_cast %19 : vector<24x128xf32> to vector<1x24x128xf32>
    %cst_8 = arith.constant dense<0.000000e+00> : vector<1xf32>
    %21 = vector.multi_reduction <add>, %20, %cst_8 [1, 2] : vector<1x24x128xf32> to vector<1xf32>
    %22 = vector.shape_cast %21 : vector<1xf32> to vector<1x1x1xf32>
    %23 = vector.extract %22[0, 0, 0] : f32 from vector<1x1x1xf32>
    %c1_i32 = arith.constant 1 : i32
    %24 = tpu.dynamic_rotate %8 by %c1_i32 dim 1 : vector<24x128xf32>, i32 -> vector<24x128xf32>
    %c127_i32 = arith.constant 127 : i32
    %25 = tpu.dynamic_rotate %8 by %c127_i32 dim 1 : vector<24x128xf32>, i32 -> vector<24x128xf32>
    %26 = arith.subf %24, %25 : vector<24x128xf32>
    %cst_9 = arith.constant 2.000000e+00 : f32
    %27 = vector.broadcast %cst_9 : f32 to vector<24x128xf32>
    %28 = arith.mulf %27, %8 : vector<24x128xf32>
    %29 = arith.addf %24, %28 : vector<24x128xf32>
    %30 = arith.addf %29, %25 : vector<24x128xf32>
    %c1_i32_10 = arith.constant 1 : i32
    %31 = tpu.dynamic_rotate %26 by %c1_i32_10 dim 0 : vector<24x128xf32>, i32 -> vector<24x128xf32>
    %cst_11 = arith.constant 2.000000e+00 : f32
    %32 = vector.broadcast %cst_11 : f32 to vector<24x128xf32>
    %33 = arith.mulf %32, %26 : vector<24x128xf32>
    %34 = arith.addf %31, %33 : vector<24x128xf32>
    %c23_i32 = arith.constant 23 : i32
    %35 = tpu.dynamic_rotate %26 by %c23_i32 dim 0 : vector<24x128xf32>, i32 -> vector<24x128xf32>
    %36 = arith.addf %34, %35 : vector<24x128xf32>
    %c1_i32_12 = arith.constant 1 : i32
    %37 = tpu.dynamic_rotate %30 by %c1_i32_12 dim 0 : vector<24x128xf32>, i32 -> vector<24x128xf32>
    %c23_i32_13 = arith.constant 23 : i32
    %38 = tpu.dynamic_rotate %30 by %c23_i32_13 dim 0 : vector<24x128xf32>, i32 -> vector<24x128xf32>
    %39 = arith.subf %37, %38 : vector<24x128xf32>
    %40 = math.absf %36 : vector<24x128xf32>
    %41 = math.absf %39 : vector<24x128xf32>
    %42 = arith.addf %40, %41 : vector<24x128xf32>
    %cst_14 = arith.constant 0.000000e+00 : f32
    %43 = vector.broadcast %cst_14 : f32 to vector<24x128xf32>
    %44 = arith.select %5, %42, %43 : vector<24x128xi1>, vector<24x128xf32>
    %45 = vector.shape_cast %44 : vector<24x128xf32> to vector<1x24x128xf32>
    %cst_15 = arith.constant dense<0.000000e+00> : vector<1xf32>
    %46 = vector.multi_reduction <add>, %45, %cst_15 [1, 2] : vector<1x24x128xf32> to vector<1xf32>
    %47 = vector.shape_cast %46 : vector<1xf32> to vector<1x1x1xf32>
    %48 = vector.extract %47[0, 0, 0] : f32 from vector<1x1x1xf32>
    %49 = tpu.iota {dimensions = array<i32: 1>} : vector<8x128xi32>
    %c0_i32 = arith.constant 0 : i32
    %50 = vector.broadcast %c0_i32 : i32 to vector<8x128xi32>
    %51 = arith.cmpi eq, %49, %50 : vector<8x128xi32>
    %cst_16 = arith.constant 0.000000e+00 : f32
    %52 = vector.broadcast %14 : f32 to vector<8x128xf32>
    %53 = vector.broadcast %cst_16 : f32 to vector<8x128xf32>
    %54 = arith.select %51, %52, %53 : vector<8x128xi1>, vector<8x128xf32>
    %c1_i32_17 = arith.constant 1 : i32
    %55 = vector.broadcast %c1_i32_17 : i32 to vector<8x128xi32>
    %56 = arith.cmpi eq, %49, %55 : vector<8x128xi32>
    %cst_18 = arith.constant 0.000000e+00 : f32
    %57 = vector.broadcast %18 : f32 to vector<8x128xf32>
    %58 = vector.broadcast %cst_18 : f32 to vector<8x128xf32>
    %59 = arith.select %56, %57, %58 : vector<8x128xi1>, vector<8x128xf32>
    %60 = arith.addf %54, %59 : vector<8x128xf32>
    %c2_i32 = arith.constant 2 : i32
    %61 = vector.broadcast %c2_i32 : i32 to vector<8x128xi32>
    %62 = arith.cmpi eq, %49, %61 : vector<8x128xi32>
    %cst_19 = arith.constant 0.000000e+00 : f32
    %63 = vector.broadcast %23 : f32 to vector<8x128xf32>
    %64 = vector.broadcast %cst_19 : f32 to vector<8x128xf32>
    %65 = arith.select %62, %63, %64 : vector<8x128xi1>, vector<8x128xf32>
    %66 = arith.addf %60, %65 : vector<8x128xf32>
    %c3_i32 = arith.constant 3 : i32
    %67 = vector.broadcast %c3_i32 : i32 to vector<8x128xi32>
    %68 = arith.cmpi eq, %49, %67 : vector<8x128xi32>
    %cst_20 = arith.constant 0.000000e+00 : f32
    %69 = vector.broadcast %48 : f32 to vector<8x128xf32>
    %70 = vector.broadcast %cst_20 : f32 to vector<8x128xf32>
    %71 = arith.select %68, %69, %70 : vector<8x128xi1>, vector<8x128xf32>
    %72 = arith.addf %66, %71 : vector<8x128xf32>
    %c0_21 = arith.constant 0 : index
    %c0_22 = arith.constant 0 : index
    %c0_23 = arith.constant 0 : index
    %73 = vector.load %arg3[%c0_21, %c0_22, %c0_23] : memref<1x8x128xf32, #tpu.memory_space<vmem>>, vector<1x8x128xf32>
    %74 = vector.shape_cast %73 : vector<1x8x128xf32> to vector<8x128xf32>
    %75 = vector.shape_cast %72 : vector<8x128xf32> to vector<1x8x128xf32>
    tpu.vector_store %arg3[%c0_21, %c0_22, %c0_23], %75 {strides = array<i32>} : memref<1x8x128xf32, #tpu.memory_space<vmem>>, vector<1x8x128xf32>,
    return
  }
  func.func @transform_0(%arg0: i32) -> (i32, i32, i32) {
    %c0_i32 = arith.constant 0 : i32
    %c0_i32_0 = arith.constant 0 : i32
    %c0_i32_1 = arith.constant 0 : i32
    return %arg0, %c0_i32, %c0_i32_0 : i32, i32, i32
  }
  func.func @transform_1(%arg0: i32) -> (i32, i32, i32) {
    %c0_i32 = arith.constant 0 : i32
    %c0_i32_0 = arith.constant 0 : i32
    %c0_i32_1 = arith.constant 0 : i32
    return %arg0, %c0_i32, %c0_i32_0 : i32, i32, i32
  }
  func.func @transform_2(%arg0: i32) -> (i32, i32, i32) {
    %c0_i32 = arith.constant 0 : i32
    %c0_i32_0 = arith.constant 0 : i32
    %c0_i32_1 = arith.constant 0 : i32
    return %arg0, %c0_i32, %c0_i32_0 : i32, i32, i32
  }
}

module attributes {stable_mosaic.version = 11 : i64} {
  func.func @_loss_stats_kernel(%arg0: i32, %arg1: memref<1x16x128xf32, #tpu.memory_space<vmem>>, %arg2: memref<1x16x128xf32, #tpu.memory_space<vmem>>, %arg3: memref<1x8x128xf32, #tpu.memory_space<vmem>>) attributes {dimension_semantics = [#tpu.dimension_semantics<parallel>], iteration_bounds = array<i64: 2>, scalar_prefetch = 0 : i64, scratch_operands = 0 : i64, tpu.core_type = #tpu.core_type<tc>, window_params = [{transform_indices = @transform_0, window_bounds = array<i64: 1, 16, 128>}, {transform_indices = @transform_1, window_bounds = array<i64: 1, 16, 128>}, {transform_indices = @transform_2, window_bounds = array<i64: 1, 8, 128>}]} {
    %c0 = arith.constant 0 : index
    %c0_0 = arith.constant 0 : index
    %c0_1 = arith.constant 0 : index
    %0 = vector.load %arg1[%c0, %c0_0, %c0_1] : memref<1x16x128xf32, #tpu.memory_space<vmem>>, vector<1x16x128xf32>
    %1 = vector.shape_cast %0 : vector<1x16x128xf32> to vector<16x128xf32>
    %c0_2 = arith.constant 0 : index
    %c0_3 = arith.constant 0 : index
    %c0_4 = arith.constant 0 : index
    %2 = vector.load %arg2[%c0_2, %c0_3, %c0_4] : memref<1x16x128xf32, #tpu.memory_space<vmem>>, vector<1x16x128xf32>
    %3 = vector.shape_cast %2 : vector<1x16x128xf32> to vector<16x128xf32>
    %4 = arith.cmpf one, %3, %3 : vector<16x128xf32>
    %cst = arith.constant dense<true> : vector<16x128xi1>
    %5 = arith.xori %4, %cst : vector<16x128xi1>
    %6 = arith.subf %1, %3 : vector<16x128xf32>
    %cst_5 = arith.constant 0.000000e+00 : f32
    %7 = vector.broadcast %cst_5 : f32 to vector<16x128xf32>
    %8 = arith.select %5, %6, %7 : vector<16x128xi1>, vector<16x128xf32>
    %9 = arith.extui %5 : vector<16x128xi1> to vector<16x128xi32>
    %10 = arith.sitofp %9 : vector<16x128xi32> to vector<16x128xf32>
    %11 = vector.shape_cast %10 : vector<16x128xf32> to vector<1x16x128xf32>
    %cst_6 = arith.constant dense<0.000000e+00> : vector<1xf32>
    %12 = vector.multi_reduction <add>, %11, %cst_6 [1, 2] : vector<1x16x128xf32> to vector<1xf32>
    %13 = vector.shape_cast %12 : vector<1xf32> to vector<1x1x1xf32>
    %14 = vector.extract %13[0, 0, 0] : f32 from vector<1x1x1xf32>
    %15 = vector.shape_cast %8 : vector<16x128xf32> to vector<1x16x128xf32>
    %cst_7 = arith.constant dense<0.000000e+00> : vector<1xf32>
    %16 = vector.multi_reduction <add>, %15, %cst_7 [1, 2] : vector<1x16x128xf32> to vector<1xf32>
    %17 = vector.shape_cast %16 : vector<1xf32> to vector<1x1x1xf32>
    %18 = vector.extract %17[0, 0, 0] : f32 from vector<1x1x1xf32>
    %19 = arith.mulf %8, %8 : vector<16x128xf32>
    %20 = vector.shape_cast %19 : vector<16x128xf32> to vector<1x16x128xf32>
    %cst_8 = arith.constant dense<0.000000e+00> : vector<1xf32>
    %21 = vector.multi_reduction <add>, %20, %cst_8 [1, 2] : vector<1x16x128xf32> to vector<1xf32>
    %22 = vector.shape_cast %21 : vector<1xf32> to vector<1x1x1xf32>
    %23 = vector.extract %22[0, 0, 0] : f32 from vector<1x1x1xf32>
    %c1_i32 = arith.constant 1 : i32
    %24 = tpu.dynamic_rotate %8 by %c1_i32 dim 1 : vector<16x128xf32>, i32 -> vector<16x128xf32>
    %c127_i32 = arith.constant 127 : i32
    %25 = tpu.dynamic_rotate %8 by %c127_i32 dim 1 : vector<16x128xf32>, i32 -> vector<16x128xf32>
    %26 = arith.subf %24, %25 : vector<16x128xf32>
    %cst_9 = arith.constant 2.000000e+00 : f32
    %27 = vector.broadcast %cst_9 : f32 to vector<16x128xf32>
    %28 = arith.mulf %27, %8 : vector<16x128xf32>
    %29 = arith.addf %24, %28 : vector<16x128xf32>
    %30 = arith.addf %29, %25 : vector<16x128xf32>
    %c1_i32_10 = arith.constant 1 : i32
    %31 = tpu.dynamic_rotate %26 by %c1_i32_10 dim 0 : vector<16x128xf32>, i32 -> vector<16x128xf32>
    %cst_11 = arith.constant 2.000000e+00 : f32
    %32 = vector.broadcast %cst_11 : f32 to vector<16x128xf32>
    %33 = arith.mulf %32, %26 : vector<16x128xf32>
    %34 = arith.addf %31, %33 : vector<16x128xf32>
    %c15_i32 = arith.constant 15 : i32
    %35 = tpu.dynamic_rotate %26 by %c15_i32 dim 0 : vector<16x128xf32>, i32 -> vector<16x128xf32>
    %36 = arith.addf %34, %35 : vector<16x128xf32>
    %c1_i32_12 = arith.constant 1 : i32
    %37 = tpu.dynamic_rotate %30 by %c1_i32_12 dim 0 : vector<16x128xf32>, i32 -> vector<16x128xf32>
    %c15_i32_13 = arith.constant 15 : i32
    %38 = tpu.dynamic_rotate %30 by %c15_i32_13 dim 0 : vector<16x128xf32>, i32 -> vector<16x128xf32>
    %39 = arith.subf %37, %38 : vector<16x128xf32>
    %40 = math.absf %36 : vector<16x128xf32>
    %41 = math.absf %39 : vector<16x128xf32>
    %42 = arith.addf %40, %41 : vector<16x128xf32>
    %cst_14 = arith.constant 0.000000e+00 : f32
    %43 = vector.broadcast %cst_14 : f32 to vector<16x128xf32>
    %44 = arith.select %5, %42, %43 : vector<16x128xi1>, vector<16x128xf32>
    %45 = vector.shape_cast %44 : vector<16x128xf32> to vector<1x16x128xf32>
    %cst_15 = arith.constant dense<0.000000e+00> : vector<1xf32>
    %46 = vector.multi_reduction <add>, %45, %cst_15 [1, 2] : vector<1x16x128xf32> to vector<1xf32>
    %47 = vector.shape_cast %46 : vector<1xf32> to vector<1x1x1xf32>
    %48 = vector.extract %47[0, 0, 0] : f32 from vector<1x1x1xf32>
    %49 = tpu.iota {dimensions = array<i32: 1>} : vector<8x128xi32>
    %c0_i32 = arith.constant 0 : i32
    %50 = vector.broadcast %c0_i32 : i32 to vector<8x128xi32>
    %51 = arith.cmpi eq, %49, %50 : vector<8x128xi32>
    %cst_16 = arith.constant 0.000000e+00 : f32
    %52 = vector.broadcast %14 : f32 to vector<8x128xf32>
    %53 = vector.broadcast %cst_16 : f32 to vector<8x128xf32>
    %54 = arith.select %51, %52, %53 : vector<8x128xi1>, vector<8x128xf32>
    %c1_i32_17 = arith.constant 1 : i32
    %55 = vector.broadcast %c1_i32_17 : i32 to vector<8x128xi32>
    %56 = arith.cmpi eq, %49, %55 : vector<8x128xi32>
    %cst_18 = arith.constant 0.000000e+00 : f32
    %57 = vector.broadcast %18 : f32 to vector<8x128xf32>
    %58 = vector.broadcast %cst_18 : f32 to vector<8x128xf32>
    %59 = arith.select %56, %57, %58 : vector<8x128xi1>, vector<8x128xf32>
    %60 = arith.addf %54, %59 : vector<8x128xf32>
    %c2_i32 = arith.constant 2 : i32
    %61 = vector.broadcast %c2_i32 : i32 to vector<8x128xi32>
    %62 = arith.cmpi eq, %49, %61 : vector<8x128xi32>
    %cst_19 = arith.constant 0.000000e+00 : f32
    %63 = vector.broadcast %23 : f32 to vector<8x128xf32>
    %64 = vector.broadcast %cst_19 : f32 to vector<8x128xf32>
    %65 = arith.select %62, %63, %64 : vector<8x128xi1>, vector<8x128xf32>
    %66 = arith.addf %60, %65 : vector<8x128xf32>
    %c3_i32 = arith.constant 3 : i32
    %67 = vector.broadcast %c3_i32 : i32 to vector<8x128xi32>
    %68 = arith.cmpi eq, %49, %67 : vector<8x128xi32>
    %cst_20 = arith.constant 0.000000e+00 : f32
    %69 = vector.broadcast %48 : f32 to vector<8x128xf32>
    %70 = vector.broadcast %cst_20 : f32 to vector<8x128xf32>
    %71 = arith.select %68, %69, %70 : vector<8x128xi1>, vector<8x128xf32>
    %72 = arith.addf %66, %71 : vector<8x128xf32>
    %c0_21 = arith.constant 0 : index
    %c0_22 = arith.constant 0 : index
    %c0_23 = arith.constant 0 : index
    %73 = vector.load %arg3[%c0_21, %c0_22, %c0_23] : memref<1x8x128xf32, #tpu.memory_space<vmem>>, vector<1x8x128xf32>
    %74 = vector.shape_cast %73 : vector<1x8x128xf32> to vector<8x128xf32>
    %75 = vector.shape_cast %72 : vector<8x128xf32> to vector<1x8x128xf32>
    tpu.vector_store %arg3[%c0_21, %c0_22, %c0_23], %75 {strides = array<i32>} : memref<1x8x128xf32, #tpu.memory_space<vmem>>, vector<1x8x128xf32>,
    return
  }
  func.func @transform_0(%arg0: i32) -> (i32, i32, i32) {
    %c0_i32 = arith.constant 0 : i32
    %c0_i32_0 = arith.constant 0 : i32
    %c0_i32_1 = arith.constant 0 : i32
    return %arg0, %c0_i32, %c0_i32_0 : i32, i32, i32
  }
  func.func @transform_1(%arg0: i32) -> (i32, i32, i32) {
    %c0_i32 = arith.constant 0 : i32
    %c0_i32_0 = arith.constant 0 : i32
    %c0_i32_1 = arith.constant 0 : i32
    return %arg0, %c0_i32, %c0_i32_0 : i32, i32, i32
  }
  func.func @transform_2(%arg0: i32) -> (i32, i32, i32) {
    %c0_i32 = arith.constant 0 : i32
    %c0_i32_0 = arith.constant 0 : i32
    %c0_i32_1 = arith.constant 0 : i32
    return %arg0, %c0_i32, %c0_i32_0 : i32, i32, i32
  }
}

module attributes {stable_mosaic.version = 11 : i64} {
  func.func @_loss_stats_kernel(%arg0: i32, %arg1: memref<1x8x128xf32, #tpu.memory_space<vmem>>, %arg2: memref<1x8x128xf32, #tpu.memory_space<vmem>>, %arg3: memref<1x8x128xf32, #tpu.memory_space<vmem>>) attributes {dimension_semantics = [#tpu.dimension_semantics<parallel>], iteration_bounds = array<i64: 2>, scalar_prefetch = 0 : i64, scratch_operands = 0 : i64, tpu.core_type = #tpu.core_type<tc>, window_params = [{transform_indices = @transform_0, window_bounds = array<i64: 1, 8, 128>}, {transform_indices = @transform_1, window_bounds = array<i64: 1, 8, 128>}, {transform_indices = @transform_2, window_bounds = array<i64: 1, 8, 128>}]} {
    %c0 = arith.constant 0 : index
    %c0_0 = arith.constant 0 : index
    %c0_1 = arith.constant 0 : index
    %0 = vector.load %arg1[%c0, %c0_0, %c0_1] : memref<1x8x128xf32, #tpu.memory_space<vmem>>, vector<1x8x128xf32>
    %1 = vector.shape_cast %0 : vector<1x8x128xf32> to vector<8x128xf32>
    %c0_2 = arith.constant 0 : index
    %c0_3 = arith.constant 0 : index
    %c0_4 = arith.constant 0 : index
    %2 = vector.load %arg2[%c0_2, %c0_3, %c0_4] : memref<1x8x128xf32, #tpu.memory_space<vmem>>, vector<1x8x128xf32>
    %3 = vector.shape_cast %2 : vector<1x8x128xf32> to vector<8x128xf32>
    %4 = arith.cmpf one, %3, %3 : vector<8x128xf32>
    %cst = arith.constant dense<true> : vector<8x128xi1>
    %5 = arith.xori %4, %cst : vector<8x128xi1>
    %6 = arith.subf %1, %3 : vector<8x128xf32>
    %cst_5 = arith.constant 0.000000e+00 : f32
    %7 = vector.broadcast %cst_5 : f32 to vector<8x128xf32>
    %8 = arith.select %5, %6, %7 : vector<8x128xi1>, vector<8x128xf32>
    %9 = arith.extui %5 : vector<8x128xi1> to vector<8x128xi32>
    %10 = arith.sitofp %9 : vector<8x128xi32> to vector<8x128xf32>
    %11 = vector.shape_cast %10 : vector<8x128xf32> to vector<1x8x128xf32>
    %cst_6 = arith.constant dense<0.000000e+00> : vector<1xf32>
    %12 = vector.multi_reduction <add>, %11, %cst_6 [1, 2] : vector<1x8x128xf32> to vector<1xf32>
    %13 = vector.shape_cast %12 : vector<1xf32> to vector<1x1x1xf32>
    %14 = vector.extract %13[0, 0, 0] : f32 from vector<1x1x1xf32>
    %15 = vector.shape_cast %8 : vector<8x128xf32> to vector<1x8x128xf32>
    %cst_7 = arith.constant dense<0.000000e+00> : vector<1xf32>
    %16 = vector.multi_reduction <add>, %15, %cst_7 [1, 2] : vector<1x8x128xf32> to vector<1xf32>
    %17 = vector.shape_cast %16 : vector<1xf32> to vector<1x1x1xf32>
    %18 = vector.extract %17[0, 0, 0] : f32 from vector<1x1x1xf32>
    %19 = arith.mulf %8, %8 : vector<8x128xf32>
    %20 = vector.shape_cast %19 : vector<8x128xf32> to vector<1x8x128xf32>
    %cst_8 = arith.constant dense<0.000000e+00> : vector<1xf32>
    %21 = vector.multi_reduction <add>, %20, %cst_8 [1, 2] : vector<1x8x128xf32> to vector<1xf32>
    %22 = vector.shape_cast %21 : vector<1xf32> to vector<1x1x1xf32>
    %23 = vector.extract %22[0, 0, 0] : f32 from vector<1x1x1xf32>
    %c1_i32 = arith.constant 1 : i32
    %24 = tpu.dynamic_rotate %8 by %c1_i32 dim 1 : vector<8x128xf32>, i32 -> vector<8x128xf32>
    %c127_i32 = arith.constant 127 : i32
    %25 = tpu.dynamic_rotate %8 by %c127_i32 dim 1 : vector<8x128xf32>, i32 -> vector<8x128xf32>
    %26 = arith.subf %24, %25 : vector<8x128xf32>
    %cst_9 = arith.constant 2.000000e+00 : f32
    %27 = vector.broadcast %cst_9 : f32 to vector<8x128xf32>
    %28 = arith.mulf %27, %8 : vector<8x128xf32>
    %29 = arith.addf %24, %28 : vector<8x128xf32>
    %30 = arith.addf %29, %25 : vector<8x128xf32>
    %c1_i32_10 = arith.constant 1 : i32
    %31 = tpu.dynamic_rotate %26 by %c1_i32_10 dim 0 : vector<8x128xf32>, i32 -> vector<8x128xf32>
    %cst_11 = arith.constant 2.000000e+00 : f32
    %32 = vector.broadcast %cst_11 : f32 to vector<8x128xf32>
    %33 = arith.mulf %32, %26 : vector<8x128xf32>
    %34 = arith.addf %31, %33 : vector<8x128xf32>
    %c7_i32 = arith.constant 7 : i32
    %35 = tpu.dynamic_rotate %26 by %c7_i32 dim 0 : vector<8x128xf32>, i32 -> vector<8x128xf32>
    %36 = arith.addf %34, %35 : vector<8x128xf32>
    %c1_i32_12 = arith.constant 1 : i32
    %37 = tpu.dynamic_rotate %30 by %c1_i32_12 dim 0 : vector<8x128xf32>, i32 -> vector<8x128xf32>
    %c7_i32_13 = arith.constant 7 : i32
    %38 = tpu.dynamic_rotate %30 by %c7_i32_13 dim 0 : vector<8x128xf32>, i32 -> vector<8x128xf32>
    %39 = arith.subf %37, %38 : vector<8x128xf32>
    %40 = math.absf %36 : vector<8x128xf32>
    %41 = math.absf %39 : vector<8x128xf32>
    %42 = arith.addf %40, %41 : vector<8x128xf32>
    %cst_14 = arith.constant 0.000000e+00 : f32
    %43 = vector.broadcast %cst_14 : f32 to vector<8x128xf32>
    %44 = arith.select %5, %42, %43 : vector<8x128xi1>, vector<8x128xf32>
    %45 = vector.shape_cast %44 : vector<8x128xf32> to vector<1x8x128xf32>
    %cst_15 = arith.constant dense<0.000000e+00> : vector<1xf32>
    %46 = vector.multi_reduction <add>, %45, %cst_15 [1, 2] : vector<1x8x128xf32> to vector<1xf32>
    %47 = vector.shape_cast %46 : vector<1xf32> to vector<1x1x1xf32>
    %48 = vector.extract %47[0, 0, 0] : f32 from vector<1x1x1xf32>
    %49 = tpu.iota {dimensions = array<i32: 1>} : vector<8x128xi32>
    %c0_i32 = arith.constant 0 : i32
    %50 = vector.broadcast %c0_i32 : i32 to vector<8x128xi32>
    %51 = arith.cmpi eq, %49, %50 : vector<8x128xi32>
    %cst_16 = arith.constant 0.000000e+00 : f32
    %52 = vector.broadcast %14 : f32 to vector<8x128xf32>
    %53 = vector.broadcast %cst_16 : f32 to vector<8x128xf32>
    %54 = arith.select %51, %52, %53 : vector<8x128xi1>, vector<8x128xf32>
    %c1_i32_17 = arith.constant 1 : i32
    %55 = vector.broadcast %c1_i32_17 : i32 to vector<8x128xi32>
    %56 = arith.cmpi eq, %49, %55 : vector<8x128xi32>
    %cst_18 = arith.constant 0.000000e+00 : f32
    %57 = vector.broadcast %18 : f32 to vector<8x128xf32>
    %58 = vector.broadcast %cst_18 : f32 to vector<8x128xf32>
    %59 = arith.select %56, %57, %58 : vector<8x128xi1>, vector<8x128xf32>
    %60 = arith.addf %54, %59 : vector<8x128xf32>
    %c2_i32 = arith.constant 2 : i32
    %61 = vector.broadcast %c2_i32 : i32 to vector<8x128xi32>
    %62 = arith.cmpi eq, %49, %61 : vector<8x128xi32>
    %cst_19 = arith.constant 0.000000e+00 : f32
    %63 = vector.broadcast %23 : f32 to vector<8x128xf32>
    %64 = vector.broadcast %cst_19 : f32 to vector<8x128xf32>
    %65 = arith.select %62, %63, %64 : vector<8x128xi1>, vector<8x128xf32>
    %66 = arith.addf %60, %65 : vector<8x128xf32>
    %c3_i32 = arith.constant 3 : i32
    %67 = vector.broadcast %c3_i32 : i32 to vector<8x128xi32>
    %68 = arith.cmpi eq, %49, %67 : vector<8x128xi32>
    %cst_20 = arith.constant 0.000000e+00 : f32
    %69 = vector.broadcast %48 : f32 to vector<8x128xf32>
    %70 = vector.broadcast %cst_20 : f32 to vector<8x128xf32>
    %71 = arith.select %68, %69, %70 : vector<8x128xi1>, vector<8x128xf32>
    %72 = arith.addf %66, %71 : vector<8x128xf32>
    %c0_21 = arith.constant 0 : index
    %c0_22 = arith.constant 0 : index
    %c0_23 = arith.constant 0 : index
    %73 = vector.load %arg3[%c0_21, %c0_22, %c0_23] : memref<1x8x128xf32, #tpu.memory_space<vmem>>, vector<1x8x128xf32>
    %74 = vector.shape_cast %73 : vector<1x8x128xf32> to vector<8x128xf32>
    %75 = vector.shape_cast %72 : vector<8x128xf32> to vector<1x8x128xf32>
    tpu.vector_store %arg3[%c0_21, %c0_22, %c0_23], %75 {strides = array<i32>} : memref<1x8x128xf32, #tpu.memory_space<vmem>>, vector<1x8x128xf32>,
    return
  }
  func.func @transform_0(%arg0: i32) -> (i32, i32, i32) {
    %c0_i32 = arith.constant 0 : i32
    %c0_i32_0 = arith.constant 0 : i32
    %c0_i32_1 = arith.constant 0 : i32
    return %arg0, %c0_i32, %c0_i32_0 : i32, i32, i32
  }
  func.func @transform_1(%arg0: i32) -> (i32, i32, i32) {
    %c0_i32 = arith.constant 0 : i32
    %c0_i32_0 = arith.constant 0 : i32
    %c0_i32_1 = arith.constant 0 : i32
    return %arg0, %c0_i32, %c0_i32_0 : i32, i32, i32
  }
  func.func @transform_2(%arg0: i32) -> (i32, i32, i32) {
    %c0_i32 = arith.constant 0 : i32
    %c0_i32_0 = arith.constant 0 : i32
    %c0_i32_1 = arith.constant 0 : i32
    return %arg0, %c0_i32, %c0_i32_0 : i32, i32, i32
  }
}

</mosaic_0001>

<llo_original>
// kernel: _lambda_.4
$region0: #{_lambda_.4}
  #allocation0 [shape = 'u32[]', space=smem, size = 0x4, offset = 0x4, fixed_abs, tag = 'smem constant byte address 0x4 - core index']
  #allocation1 [shape = 'u32[144,128]{1,0:T(1,128)}', space=vmem, size = 0x12000, scoped, tag = 'internal scratch']
  %s0 = inlined_call_operand.vmem [shape: f32[2,24,128], index: 0, kind: input, shape index: {}]
  %s1 = inlined_call_operand.vmem [shape: f32[2,24,128], index: 1, kind: input, shape index: {}]
  %s2 = inlined_call_operand.vmem [shape: f32[2,8,128], index: 2, kind: output, shape index: {}]
  %s3 = sld [smem:[#allocation0]]
  $region41: #{_lambda_.4} parent=0
    _
  %s5 = ssub.s32 1, %s3
  %s6 = scalar_select 0, %s5, %s3
  loop: start=0, step=1, limit=4
  $region2: #{_lambda_.4} parent=0 // loop_pre_header
    _
  $region3: #{_lambda_.4} parent=0 // loop_header
    %s8 = sphi 0, %s12
    %p9 = scmp.ge.s32.totalorder %s8, 4
    %s18 = sphi 0, %s20
    %s21 = sphi 0, %s18
    %s22 = sphi 0, %s21
    %s38 = sphi 0, %s22
    %s44 = sphi 0, %s46
    %s47 = sphi 0, %s44
    %s48 = sphi 0, %s47
    %s64 = sphi 0, %s48
    %s70 = sphi 0, %s72
    %s73 = sphi 0, %s70
    %s74 = sphi 0, %s73
    %s90 = sphi 0, %s74
  $region4: #{_lambda_.4} parent=0 // loop_header_branch
    %11 = sbr.rel (%p9) target = $region8
  $region5: #{_lambda_.4} parent=0 // loop_body
    %s13 = ssub.s32 %s8, 1
    %s14 = ssub.s32 %s8, 2
    %s15 = sadd.s32 %s8, 1
    %s16 = ssub.s32 %s8, %s15
    %p17 = scmp.eq.s32.totalorder %s16, 0
    %s19 = sadd.s32 %s18, 1
    %s20 = scalar_select %p17, %s18, %s19
    %p23 = pneg %p17
    %p24 = scmp.eq.s32.totalorder %s8, 1
    %p25 = por %p23, %p24
    %p26 = scmp.ne.s32.totalorder %s18, %s21
    %p27 = scmp.eq.s32.totalorder %s8, 0
    %p28 = por %p26, %p27
    %p29 = scmp.ne.s32.totalorder %s18, %s21
    %p30 = scmp.eq.s32.totalorder %s13, 1
    %p31 = por %p29, %p30
    %p32 = scmp.ne.s32.totalorder %s21, %s22
    %p33 = scmp.eq.s32.totalorder %s13, 0
    %p34 = por %p32, %p33
    %p35 = scmp.ne.s32.totalorder %s21, %s22
    %p36 = scmp.eq.s32.totalorder %s14, 1
    %p37 = por %p35, %p36
    %p39 = scmp.ne.s32.totalorder %s22, %s38
    %p40 = scmp.eq.s32.totalorder %s14, 0
    %p41 = por %p39, %p40
    %s42 = ssub.s32 %s8, %s15
    %p43 = scmp.eq.s32.totalorder %s42, 0
    %s45 = sadd.s32 %s44, 1
    %s46 = scalar_select %p43, %s44, %s45
    %p49 = pneg %p43
    %p50 = scmp.eq.s32.totalorder %s8, 1
    %p51 = por %p49, %p50
    %p52 = scmp.ne.s32.totalorder %s44, %s47
    %p53 = scmp.eq.s32.totalorder %s8, 0
    %p54 = por %p52, %p53
    %p55 = scmp.ne.s32.totalorder %s44, %s47
    %p56 = scmp.eq.s32.totalorder %s13, 1
    %p57 = por %p55, %p56
    %p58 = scmp.ne.s32.totalorder %s47, %s48
    %p59 = scmp.eq.s32.totalorder %s13, 0
    %p60 = por %p58, %p59
    %p61 = scmp.ne.s32.totalorder %s47, %s48
    %p62 = scmp.eq.s32.totalorder %s14, 1
    %p63 = por %p61, %p62
    %p65 = scmp.ne.s32.totalorder %s48, %s64
    %p66 = scmp.eq.s32.totalorder %s14, 0
    %p67 = por %p65, %p66
    %s68 = ssub.s32 %s8, %s15
    %p69 = scmp.eq.s32.totalorder %s68, 0
    %s71 = sadd.s32 %s70, 1
    %s72 = scalar_select %p69, %s70, %s71
    %p75 = pneg %p69
    %p76 = scmp.eq.s32.totalorder %s8, 1
    %p77 = por %p75, %p76
    %p78 = scmp.ne.s32.totalorder %s70, %s73
    %p79 = scmp.eq.s32.totalorder %s8, 0
    %p80 = por %p78, %p79
    %p81 = scmp.ne.s32.totalorder %s70, %s73
    %p82 = scmp.eq.s32.totalorder %s13, 1
    %p83 = por %p81, %p82
    %p84 = scmp.ne.s32.totalorder %s73, %s74
    %p85 = scmp.eq.s32.totalorder %s13, 0
    %p86 = por %p84, %p85
    %p87 = scmp.ne.s32.totalorder %s73, %s74
    %p88 = scmp.eq.s32.totalorder %s14, 1
    %p89 = por %p87, %p88
    %p91 = scmp.ne.s32.totalorder %s74, %s90
    %p92 = scmp.eq.s32.totalorder %s14, 0
    %p93 = por %p91, %p92
    %p94 = scmp.le.s32.totalorder 1, %s8
    %p95 = scmp.lt.s32.totalorder %s8, 3
    %p96 = pnand %p94, %p95
    %p97 = pneg %p96
    // Predicated region
    $region9: #{_lambda_.4} parent=5 // pred_check
      _
    $region10: #{_lambda_.4} parent=5 // pred_check_branch
      %99 = sbr.rel (%p96) target = $region12
    $region11: #{_lambda_.4} parent=5 // pred_region
      %s100 = ssub.s32 %s8, 1
    $region12: #{_lambda_.4} parent=5 // pred_fallthru
      _
    %p101 = scmp.lt.s32.totalorder %s8, 2
    // Predicated region
    $region13: #{_lambda_.4} parent=5 // pred_check
      %p102 = pneg %p101
    $region14: #{_lambda_.4} parent=5 // pred_check_branch
      %104 = sbr.rel (%p102) target = $region16
    $region15: #{_lambda_.4} parent=5 // pred_region
      // Predicated region
      $region17: #{_lambda_.4} parent=15 // pred_check
        %p105 = pneg %p28
      $region18: #{_lambda_.4} parent=15 // pred_check_branch
        %107 = sbr.rel (%p105) target = $region20
      $region19: #{_lambda_.4} parent=15 // pred_region
        %p108 = scmp.lt.s32.totalorder %s8, 1
        %s109 = scalar_select %p108, %s8, 1
        %s110 = smul.addr %s109, 3
        %s111 = smul.addr %s110, 8
        %s112 = scalar_lea.vmem %s0, %s111
      $region20: #{_lambda_.4} parent=15 // pred_fallthru
        _
      // Predicated region
      $region21: #{_lambda_.4} parent=15 // pred_check
        %p113 = pneg %p54
      $region22: #{_lambda_.4} parent=15 // pred_check_branch
        %115 = sbr.rel (%p113) target = $region24
      $region23: #{_lambda_.4} parent=15 // pred_region
        %p116 = scmp.lt.s32.totalorder %s8, 1
        %s117 = scalar_select %p116, %s8, 1
        %s118 = smul.addr %s117, 3
        %s119 = smul.addr %s118, 8
        %s120 = scalar_lea.vmem %s1, %s119
      $region24: #{_lambda_.4} parent=15 // pred_fallthru
        _
    $region16: #{_lambda_.4} parent=5 // pred_fallthru
      _
    %p121 = scmp.le.s32.totalorder 1, %s8
    %p122 = scmp.lt.s32.totalorder %s8, 3
    %p123 = pnand %p121, %p122
    %p124 = pneg %p123
    // Predicated region
    $region25: #{_lambda_.4} parent=5 // pred_check
      _
    $region26: #{_lambda_.4} parent=5 // pred_check_branch
      %126 = sbr.rel (%p123) target = $region28
    $region27: #{_lambda_.4} parent=5 // pred_region
      %s127 = ssub.s32 %s8, 1
      %p128 = scmp.lt.s32.totalorder %s13, 1
      %s129 = scalar_select %p128, %s13, 1
      %s130 = smul.addr %s129, 3
      %s131 = smul.addr %s130, 8
      %s132 = scalar_lea.vmem %s0, %s131
      %p133 = pneg %p34
      %p134 = pneg %p31
      %p135 = scmp.lt.s32.totalorder %s13, 1
      %s136 = scalar_select %p135, %s13, 1
      %s137 = smul.addr %s136, 3
      %s138 = smul.addr %s137, 8
      %s139 = scalar_lea.vmem %s1, %s138
      %p140 = pneg %p60
      %p141 = pneg %p57
      %p142 = pneg %p86
      %p143 = pneg %p83
      %p144 = scmp.lt.s32.totalorder %s13, 1
      %s145 = scalar_select %p144, %s13, 1
      %s146 = smul.addr %s145, 8
      %s147 = scalar_lea.vmem %s2, %s146
      %p148 = scmp.lt.s32.totalorder %s13, 1
      %s149 = scalar_select %p148, %s13, 1
      %s150 = smul.addr %s149, 3
      %s151 = smul.addr %s150, 8
      %s152 = scalar_lea.vmem %s0, %s151
      %p153 = scmp.lt.s32.totalorder %s13, 1
      %s154 = scalar_select %p153, %s13, 1
      %s155 = smul.addr %s154, 3
      %s156 = smul.addr %s155, 8
      %s157 = scalar_lea.vmem %s1, %s156
      %p158 = scmp.lt.s32.totalorder %s13, 1
      %s159 = scalar_select %p158, %s13, 1
      %s160 = smul.addr %s159, 8
      %s161 = scalar_lea.vmem %s2, %s160
      %v162 = vld [vmem:[%s152] sm:$0xff]
      %v163 = vld [vmem:[%s152 + $0x8] sm:$0xff]
      %v164 = vld [vmem:[%s152 + $0x10] sm:$0xff]
      %v165 = vld [vmem:[%s157] sm:$0xff]
      %v166 = vld [vmem:[%s157 + $0x8] sm:$0xff]
      %v167 = vld [vmem:[%s157 + $0x10] sm:$0xff]
      %vm168 = vcmp.ne.f32.partialorder %v165, %v165
      %vm169 = vcmp.ne.f32.partialorder %v166, %v166
      %vm170 = vcmp.ne.f32.partialorder %v167, %v167
      %vm171 = vmxor %vm168, 1
      %vm172 = vmxor %vm169, 1
      %vm173 = vmxor %vm170, 1
      %v174 = vsub.f32 %v162, %v165
      %v175 = vsub.f32 %v163, %v166
      %v176 = vsub.f32 %v164, %v167
      %v177 = vsel %vm171, %v174, 0.0
      %v178 = vsel %vm172, %v175, 0.0
      %v179 = vsel %vm173, %v176, 0.0
      %v180 = vsel %vm171, 1, 0
      %v181 = vsel %vm172, 1, 0
      %v182 = vsel %vm173, 1, 0
      %v183 = vcvt.s32.f32 %v180
      %v184 = vcvt.s32.f32 %v181
      %v185 = vcvt.s32.f32 %v182
      %v186 = vadd.f32 %v183, %v184
      %v187 = vadd.f32 %v186, %v185
      %188 = vadd.xlane.f32.xlu0 %v187
      %v189 = vpop.xlane.xlu0 %188
      %v190 = vrot.slane %v189, 4
      %v191 = vadd.f32 %v189, %v190
      %v192 = vrot.slane %v191, 2
      %v193 = vadd.f32 %v191, %v192
      %v194 = vrot.slane %v193, 1
      %v195 = vadd.f32 %v193, %v194
      %s196 = vtos %v195
      %v197 = vadd.f32 %v177, %v178
      %v198 = vadd.f32 %v197, %v179
      %199 = vadd.xlane.f32.xlu0 %v198
      %v200 = vpop.xlane.xlu0 %199
      %v201 = vrot.slane %v200, 4
      %v202 = vadd.f32 %v200, %v201
      %v203 = vrot.slane %v202, 2
      %v204 = vadd.f32 %v202, %v203
      %v205 = vrot.slane %v204, 1
      %v206 = vadd.f32 %v204, %v205
      %s207 = vtos %v206
      %v208 = vmul.f32 %v177, %v177
      %v209 = vmul.f32 %v178, %v178
      %v210 = vmul.f32 %v179, %v179
      %v211 = vadd.f32 %v208, %v209
      %v212 = vadd.f32 %v211, %v210
      %213 = vadd.xlane.f32.xlu0 %v212
      %v214 = vpop.xlane.xlu0 %213
      %v215 = vrot.slane %v214, 4
      %v216 = vadd.f32 %v214, %v215
      %v217 = vrot.slane %v216, 2
      %v218 = vadd.f32 %v216, %v217
      %v219 = vrot.slane %v218, 1
      %v220 = vadd.f32 %v218, %v219
      %s221 = vtos %v220
      %222 = vrot.lane.b32.xlu0 %v177, 1
      %v223 = vpop.permute.xlu0 %222
      %224 = vrot.lane.b32.xlu0 %v178, 1
      %v225 = vpop.permute.xlu0 %224
      %226 = vrot.lane.b32.xlu0 %v179, 1
      %v227 = vpop.permute.xlu0 %226
      %228 = vrot.lane.b32.xlu0 %v177, 127
      %v229 = vpop.permute.xlu0 %228
      %230 = vrot.lane.b32.xlu0 %v178, 127
      %v231 = vpop.permute.xlu0 %230
      %232 = vrot.lane.b32.xlu0 %v179, 127
      %v233 = vpop.permute.xlu0 %232
      %v234 = vsub.f32 %v223, %v229
      %v235 = vsub.f32 %v225, %v231
      %v236 = vsub.f32 %v227, %v233
      %v237 = vmul.f32 %v177, 2.0
      %v238 = vmul.f32 %v178, 2.0
      %v239 = vmul.f32 %v179, 2.0
      %v240 = vadd.f32 %v223, %v237
      %v241 = vadd.f32 %v225, %v238
      %v242 = vadd.f32 %v227, %v239
      %v243 = vadd.f32 %v240, %v229
      %v244 = vadd.f32 %v241, %v231
      %v245 = vadd.f32 %v242, %v233
      %v246 = vrot.slane %v234, 7
      %v247 = vrot.slane %v235, 7
      %v248 = vrot.slane %v236, 7
      %v249 = vlaneseq
      %v250 = vshrl.u32 %v249, 7
      %vm251 = vcmp.lt.s32.totalorder %v250, 1
      %v252 = vsel %vm251, %v247, %v248
      %v253 = vsel %vm251, %v246, %v247
      %v254 = vsel %vm251, %v248, %v246
      %v255 = vmul.f32 %v234, 2.0
      %v256 = vmul.f32 %v235, 2.0
      %v257 = vmul.f32 %v236, 2.0
      %v258 = vadd.f32 %v254, %v255
      %v259 = vadd.f32 %v253, %v256
      %v260 = vadd.f32 %v252, %v257
      %v261 = vrot.slane %v234, 1
      %v262 = vrot.slane %v235, 1
      %v263 = vrot.slane %v236, 1
      %vm264 = vcmp.lt.s32.totalorder %v250, 7
      %v265 = vsel %vm264, %v262, %v263
      %v266 = vsel %vm264, %v261, %v262
      %v267 = vsel %vm264, %v263, %v261
      %v268 = vadd.f32 %v258, %v266
      %v269 = vadd.f32 %v259, %v265
      %v270 = vadd.f32 %v260, %v267
      %v271 = vrot.slane %v243, 7
      %v272 = vrot.slane %v244, 7
      %v273 = vrot.slane %v245, 7
      %v274 = vsel %vm251, %v272, %v273
      %v275 = vsel %vm251, %v271, %v272
      %v276 = vsel %vm251, %v273, %v271
      %v277 = vrot.slane %v243, 1
      %v278 = vrot.slane %v244, 1
      %v279 = vrot.slane %v245, 1
      %v280 = vsel %vm264, %v278, %v279
      %v281 = vsel %vm264, %v277, %v278
      %v282 = vsel %vm264, %v279, %v277
      %v283 = vsub.f32 %v276, %v281
      %v284 = vsub.f32 %v275, %v280
      %v285 = vsub.f32 %v274, %v282
      %v286 = vand.u32 2147483647, %v268
      %v287 = vand.u32 2147483647, %v269
      %v288 = vand.u32 2147483647, %v270
      %v289 = vand.u32 2147483647, %v283
      %v290 = vand.u32 2147483647, %v284
      %v291 = vand.u32 2147483647, %v285
      %v292 = vadd.f32 %v286, %v289
      %v293 = vadd.f32 %v287, %v290
      %v294 = vadd.f32 %v288, %v291
      %v295 = vsel %vm171, %v292, 0.0
      %v296 = vsel %vm172, %v293, 0.0
      %v297 = vsel %vm173, %v294, 0.0
      %v298 = vadd.f32 %v295, %v296
      %v299 = vadd.f32 %v298, %v297
      %300 = vadd.xlane.f32.xlu0 %v299
      %v301 = vpop.xlane.xlu0 %300
      %v302 = vrot.slane %v301, 4
      %v303 = vadd.f32 %v301, %v302
      %v304 = vrot.slane %v303, 2
      %v305 = vadd.f32 %v303, %v304
      %v306 = vrot.slane %v305, 1
      %v307 = vadd.f32 %v305, %v306
      %s308 = vtos %v307
      %v309 = vlaneseq
      %v310 = vand.u32 %v309, 127
      %vm311 = vcmp.eq.s32.totalorder %v310, 0
      %v312 = vstv %s196
      %v313 = vsel %vm311, %v312, 0.0
      %vm314 = vcmp.eq.s32.totalorder %v310, 1
      %v315 = vstv %s207
      %v316 = vsel %vm314, %v315, 0.0
      %v317 = vadd.f32 %v313, %v316
      %vm318 = vcmp.eq.s32.totalorder %v310, 2
      %v319 = vstv %s221
      %v320 = vsel %vm318, %v319, 0.0
      %v321 = vadd.f32 %v317, %v320
      %vm322 = vcmp.eq.s32.totalorder %v310, 3
      %v323 = vstv %s308
      %v324 = vsel %vm322, %v323, 0.0
      %v325 = vadd.f32 %v321, %v324
      %326 = vst [vmem:[%s161] sm:$0xff] %v325
      %p327 = scmp.lt.s32.totalorder %s13, 1
      %s328 = scalar_select %p327, %s13, 1
      %s329 = smul.addr %s328, 8
      %s330 = scalar_lea.vmem %s2, %s329
      // Predicated region
      $region29: #{_lambda_.4} parent=27 // pred_check
        %p331 = pneg %p83
      $region30: #{_lambda_.4} parent=27 // pred_check_branch
        %333 = sbr.rel (%p331) target = $region32
      $region31: #{_lambda_.4} parent=27 // pred_region
        _
      $region32: #{_lambda_.4} parent=27 // pred_fallthru
        _
    $region28: #{_lambda_.4} parent=5 // pred_fallthru
      _
    %p334 = scmp.le.s32.totalorder 2, %s8
    // Predicated region
    $region33: #{_lambda_.4} parent=5 // pred_check
      %p335 = pneg %p334
    $region34: #{_lambda_.4} parent=5 // pred_check_branch
      %337 = sbr.rel (%p335) target = $region36
    $region35: #{_lambda_.4} parent=5 // pred_region
      %s338 = ssub.s32 %s8, 2
      // Predicated region
      $region37: #{_lambda_.4} parent=35 // pred_check
        %p339 = pneg %p89
      $region38: #{_lambda_.4} parent=35 // pred_check_branch
        %341 = sbr.rel (%p339) target = $region40
      $region39: #{_lambda_.4} parent=35 // pred_region
        %p342 = scmp.lt.s32.totalorder %s14, 1
        %s343 = scalar_select %p342, %s14, 1
        %s344 = smul.addr %s343, 8
        %s345 = scalar_lea.vmem %s2, %s344
      $region40: #{_lambda_.4} parent=35 // pred_fallthru
        _
    $region36: #{_lambda_.4} parent=5 // pred_fallthru
      _
  $region6: #{_lambda_.4} parent=0 // loop_footer
    %s12 = sadd.s32 1, %s8
  $region7: #{_lambda_.4} parent=0 // loop_footer_branch
    %7 = sbr.rel target = $region3
  $region8: #{_lambda_.4} parent=0 // loop_exit
    _

// kernel: _lambda_.5
$region0: #{_lambda_.5}
  #allocation0 [shape = 'u32[]', space=smem, size = 0x4, offset = 0x4, fixed_abs, tag = 'smem constant byte address 0x4 - core index']
  #allocation1 [shape = 'u32[144,128]{1,0:T(1,128)}', space=vmem, size = 0x12000, scoped, tag = 'internal scratch']
  %s0 = inlined_call_operand.vmem [shape: f32[2,16,128], index: 0, kind: input, shape index: {}]
  %s1 = inlined_call_operand.vmem [shape: f32[2,16,128], index: 1, kind: input, shape index: {}]
  %s2 = inlined_call_operand.vmem [shape: f32[2,8,128], index: 2, kind: output, shape index: {}]
  %s3 = sld [smem:[#allocation0]]
  $region41: #{_lambda_.5} parent=0
    _
  %s5 = ssub.s32 1, %s3
  %s6 = scalar_select 0, %s5, %s3
  loop: start=0, step=1, limit=4
  $region2: #{_lambda_.5} parent=0 // loop_pre_header
    _
  $region3: #{_lambda_.5} parent=0 // loop_header
    %s8 = sphi 0, %s12
    %p9 = scmp.ge.s32.totalorder %s8, 4
    %s18 = sphi 0, %s20
    %s21 = sphi 0, %s18
    %s22 = sphi 0, %s21
    %s38 = sphi 0, %s22
    %s44 = sphi 0, %s46
    %s47 = sphi 0, %s44
    %s48 = sphi 0, %s47
    %s64 = sphi 0, %s48
    %s70 = sphi 0, %s72
    %s73 = sphi 0, %s70
    %s74 = sphi 0, %s73
    %s90 = sphi 0, %s74
  $region4: #{_lambda_.5} parent=0 // loop_header_branch
    %11 = sbr.rel (%p9) target = $region8
  $region5: #{_lambda_.5} parent=0 // loop_body
    %s13 = ssub.s32 %s8, 1
    %s14 = ssub.s32 %s8, 2
    %s15 = sadd.s32 %s8, 1
    %s16 = ssub.s32 %s8, %s15
    %p17 = scmp.eq.s32.totalorder %s16, 0
    %s19 = sadd.s32 %s18, 1
    %s20 = scalar_select %p17, %s18, %s19
    %p23 = pneg %p17
    %p24 = scmp.eq.s32.totalorder %s8, 1
    %p25 = por %p23, %p24
    %p26 = scmp.ne.s32.totalorder %s18, %s21
    %p27 = scmp.eq.s32.totalorder %s8, 0
    %p28 = por %p26, %p27
    %p29 = scmp.ne.s32.totalorder %s18, %s21
    %p30 = scmp.eq.s32.totalorder %s13, 1
    %p31 = por %p29, %p30
    %p32 = scmp.ne.s32.totalorder %s21, %s22
    %p33 = scmp.eq.s32.totalorder %s13, 0
    %p34 = por %p32, %p33
    %p35 = scmp.ne.s32.totalorder %s21, %s22
    %p36 = scmp.eq.s32.totalorder %s14, 1
    %p37 = por %p35, %p36
    %p39 = scmp.ne.s32.totalorder %s22, %s38
    %p40 = scmp.eq.s32.totalorder %s14, 0
    %p41 = por %p39, %p40
    %s42 = ssub.s32 %s8, %s15
    %p43 = scmp.eq.s32.totalorder %s42, 0
    %s45 = sadd.s32 %s44, 1
    %s46 = scalar_select %p43, %s44, %s45
    %p49 = pneg %p43
    %p50 = scmp.eq.s32.totalorder %s8, 1
    %p51 = por %p49, %p50
    %p52 = scmp.ne.s32.totalorder %s44, %s47
    %p53 = scmp.eq.s32.totalorder %s8, 0
    %p54 = por %p52, %p53
    %p55 = scmp.ne.s32.totalorder %s44, %s47
    %p56 = scmp.eq.s32.totalorder %s13, 1
    %p57 = por %p55, %p56
    %p58 = scmp.ne.s32.totalorder %s47, %s48
    %p59 = scmp.eq.s32.totalorder %s13, 0
    %p60 = por %p58, %p59
    %p61 = scmp.ne.s32.totalorder %s47, %s48
    %p62 = scmp.eq.s32.totalorder %s14, 1
    %p63 = por %p61, %p62
    %p65 = scmp.ne.s32.totalorder %s48, %s64
    %p66 = scmp.eq.s32.totalorder %s14, 0
    %p67 = por %p65, %p66
    %s68 = ssub.s32 %s8, %s15
    %p69 = scmp.eq.s32.totalorder %s68, 0
    %s71 = sadd.s32 %s70, 1
    %s72 = scalar_select %p69, %s70, %s71
    %p75 = pneg %p69
    %p76 = scmp.eq.s32.totalorder %s8, 1
    %p77 = por %p75, %p76
    %p78 = scmp.ne.s32.totalorder %s70, %s73
    %p79 = scmp.eq.s32.totalorder %s8, 0
    %p80 = por %p78, %p79
    %p81 = scmp.ne.s32.totalorder %s70, %s73
    %p82 = scmp.eq.s32.totalorder %s13, 1
    %p83 = por %p81, %p82
    %p84 = scmp.ne.s32.totalorder %s73, %s74
    %p85 = scmp.eq.s32.totalorder %s13, 0
    %p86 = por %p84, %p85
    %p87 = scmp.ne.s32.totalorder %s73, %s74
    %p88 = scmp.eq.s32.totalorder %s14, 1
    %p89 = por %p87, %p88
    %p91 = scmp.ne.s32.totalorder %s74, %s90
    %p92 = scmp.eq.s32.totalorder %s14, 0
    %p93 = por %p91, %p92
    %p94 = scmp.le.s32.totalorder 1, %s8
    %p95 = scmp.lt.s32.totalorder %s8, 3
    %p96 = pnand %p94, %p95
    %p97 = pneg %p96
    // Predicated region
    $region9: #{_lambda_.5} parent=5 // pred_check
      _
    $region10: #{_lambda_.5} parent=5 // pred_check_branch
      %99 = sbr.rel (%p96) target = $region12
    $region11: #{_lambda_.5} parent=5 // pred_region
      %s100 = ssub.s32 %s8, 1
    $region12: #{_lambda_.5} parent=5 // pred_fallthru
      _
    %p101 = scmp.lt.s32.totalorder %s8, 2
    // Predicated region
    $region13: #{_lambda_.5} parent=5 // pred_check
      %p102 = pneg %p101
    $region14: #{_lambda_.5} parent=5 // pred_check_branch
      %104 = sbr.rel (%p102) target = $region16
    $region15: #{_lambda_.5} parent=5 // pred_region
      // Predicated region
      $region17: #{_lambda_.5} parent=15 // pred_check
        %p105 = pneg %p28
      $region18: #{_lambda_.5} parent=15 // pred_check_branch
        %107 = sbr.rel (%p105) target = $region20
      $region19: #{_lambda_.5} parent=15 // pred_region
        %p108 = scmp.lt.s32.totalorder %s8, 1
        %s109 = scalar_select %p108, %s8, 1
        %s110 = smul.addr %s109, 2
        %s111 = smul.addr %s110, 8
        %s112 = scalar_lea.vmem %s0, %s111
      $region20: #{_lambda_.5} parent=15 // pred_fallthru
        _
      // Predicated region
      $region21: #{_lambda_.5} parent=15 // pred_check
        %p113 = pneg %p54
      $region22: #{_lambda_.5} parent=15 // pred_check_branch
        %115 = sbr.rel (%p113) target = $region24
      $region23: #{_lambda_.5} parent=15 // pred_region
        %p116 = scmp.lt.s32.totalorder %s8, 1
        %s117 = scalar_select %p116, %s8, 1
        %s118 = smul.addr %s117, 2
        %s119 = smul.addr %s118, 8
        %s120 = scalar_lea.vmem %s1, %s119
      $region24: #{_lambda_.5} parent=15 // pred_fallthru
        _
    $region16: #{_lambda_.5} parent=5 // pred_fallthru
      _
    %p121 = scmp.le.s32.totalorder 1, %s8
    %p122 = scmp.lt.s32.totalorder %s8, 3
    %p123 = pnand %p121, %p122
    %p124 = pneg %p123
    // Predicated region
    $region25: #{_lambda_.5} parent=5 // pred_check
      _
    $region26: #{_lambda_.5} parent=5 // pred_check_branch
      %126 = sbr.rel (%p123) target = $region28
    $region27: #{_lambda_.5} parent=5 // pred_region
      %s127 = ssub.s32 %s8, 1
      %p128 = scmp.lt.s32.totalorder %s13, 1
      %s129 = scalar_select %p128, %s13, 1
      %s130 = smul.addr %s129, 2
      %s131 = smul.addr %s130, 8
      %s132 = scalar_lea.vmem %s0, %s131
      %p133 = pneg %p34
      %p134 = pneg %p31
      %p135 = scmp.lt.s32.totalorder %s13, 1
      %s136 = scalar_select %p135, %s13, 1
      %s137 = smul.addr %s136, 2
      %s138 = smul.addr %s137, 8
      %s139 = scalar_lea.vmem %s1, %s138
      %p140 = pneg %p60
      %p141 = pneg %p57
      %p142 = pneg %p86
      %p143 = pneg %p83
      %p144 = scmp.lt.s32.totalorder %s13, 1
      %s145 = scalar_select %p144, %s13, 1
      %s146 = smul.addr %s145, 8
      %s147 = scalar_lea.vmem %s2, %s146
      %p148 = scmp.lt.s32.totalorder %s13, 1
      %s149 = scalar_select %p148, %s13, 1
      %s150 = smul.addr %s149, 2
      %s151 = smul.addr %s150, 8
      %s152 = scalar_lea.vmem %s0, %s151
      %p153 = scmp.lt.s32.totalorder %s13, 1
      %s154 = scalar_select %p153, %s13, 1
      %s155 = smul.addr %s154, 2
      %s156 = smul.addr %s155, 8
      %s157 = scalar_lea.vmem %s1, %s156
      %p158 = scmp.lt.s32.totalorder %s13, 1
      %s159 = scalar_select %p158, %s13, 1
      %s160 = smul.addr %s159, 8
      %s161 = scalar_lea.vmem %s2, %s160
      %v162 = vld [vmem:[%s152] sm:$0xff]
      %v163 = vld [vmem:[%s152 + $0x8] sm:$0xff]
      %v164 = vld [vmem:[%s157] sm:$0xff]
      %v165 = vld [vmem:[%s157 + $0x8] sm:$0xff]
      %vm166 = vcmp.ne.f32.partialorder %v164, %v164
      %vm167 = vcmp.ne.f32.partialorder %v165, %v165
      %vm168 = vmxor %vm166, 1
      %vm169 = vmxor %vm167, 1
      %v170 = vsub.f32 %v162, %v164
      %v171 = vsub.f32 %v163, %v165
      %v172 = vsel %vm168, %v170, 0.0
      %v173 = vsel %vm169, %v171, 0.0
      %v174 = vsel %vm168, 1, 0
      %v175 = vsel %vm169, 1, 0
      %v176 = vcvt.s32.f32 %v174
      %v177 = vcvt.s32.f32 %v175
      %v178 = vadd.f32 %v176, %v177
      %179 = vadd.xlane.f32.xlu0 %v178
      %v180 = vpop.xlane.xlu0 %179
      %v181 = vrot.slane %v180, 4
      %v182 = vadd.f32 %v180, %v181
      %v183 = vrot.slane %v182, 2
      %v184 = vadd.f32 %v182, %v183
      %v185 = vrot.slane %v184, 1
      %v186 = vadd.f32 %v184, %v185
      %s187 = vtos %v186
      %v188 = vadd.f32 %v172, %v173
      %189 = vadd.xlane.f32.xlu0 %v188
      %v190 = vpop.xlane.xlu0 %189
      %v191 = vrot.slane %v190, 4
      %v192 = vadd.f32 %v190, %v191
      %v193 = vrot.slane %v192, 2
      %v194 = vadd.f32 %v192, %v193
      %v195 = vrot.slane %v194, 1
      %v196 = vadd.f32 %v194, %v195
      %s197 = vtos %v196
      %v198 = vmul.f32 %v172, %v172
      %v199 = vmul.f32 %v173, %v173
      %v200 = vadd.f32 %v198, %v199
      %201 = vadd.xlane.f32.xlu0 %v200
      %v202 = vpop.xlane.xlu0 %201
      %v203 = vrot.slane %v202, 4
      %v204 = vadd.f32 %v202, %v203
      %v205 = vrot.slane %v204, 2
      %v206 = vadd.f32 %v204, %v205
      %v207 = vrot.slane %v206, 1
      %v208 = vadd.f32 %v206, %v207
      %s209 = vtos %v208
      %210 = vrot.lane.b32.xlu0 %v172, 1
      %v211 = vpop.permute.xlu0 %210
      %212 = vrot.lane.b32.xlu0 %v173, 1
      %v213 = vpop.permute.xlu0 %212
      %214 = vrot.lane.b32.xlu0 %v172, 127
      %v215 = vpop.permute.xlu0 %214
      %216 = vrot.lane.b32.xlu0 %v173, 127
      %v217 = vpop.permute.xlu0 %216
      %v218 = vsub.f32 %v211, %v215
      %v219 = vsub.f32 %v213, %v217
      %v220 = vmul.f32 %v172, 2.0
      %v221 = vmul.f32 %v173, 2.0
      %v222 = vadd.f32 %v211, %v220
      %v223 = vadd.f32 %v213, %v221
      %v224 = vadd.f32 %v222, %v215
      %v225 = vadd.f32 %v223, %v217
      %v226 = vrot.slane %v218, 7
      %v227 = vrot.slane %v219, 7
      %v228 = vlaneseq
      %v229 = vshrl.u32 %v228, 7
      %vm230 = vcmp.lt.s32.totalorder %v229, 1
      %v231 = vsel %vm230, %v226, %v227
      %v232 = vsel %vm230, %v227, %v226
      %v233 = vmul.f32 %v218, 2.0
      %v234 = vmul.f32 %v219, 2.0
      %v235 = vadd.f32 %v232, %v233
      %v236 = vadd.f32 %v231, %v234
      %v237 = vrot.slane %v218, 1
      %v238 = vrot.slane %v219, 1
      %vm239 = vcmp.lt.s32.totalorder %v229, 7
      %v240 = vsel %vm239, %v237, %v238
      %v241 = vsel %vm239, %v238, %v237
      %v242 = vadd.f32 %v235, %v240
      %v243 = vadd.f32 %v236, %v241
      %v244 = vrot.slane %v224, 7
      %v245 = vrot.slane %v225, 7
      %v246 = vsel %vm230, %v244, %v245
      %v247 = vsel %vm230, %v245, %v244
      %v248 = vrot.slane %v224, 1
      %v249 = vrot.slane %v225, 1
      %v250 = vsel %vm239, %v248, %v249
      %v251 = vsel %vm239, %v249, %v248
      %v252 = vsub.f32 %v247, %v250
      %v253 = vsub.f32 %v246, %v251
      %v254 = vand.u32 2147483647, %v242
      %v255 = vand.u32 2147483647, %v243
      %v256 = vand.u32 2147483647, %v252
      %v257 = vand.u32 2147483647, %v253
      %v258 = vadd.f32 %v254, %v256
      %v259 = vadd.f32 %v255, %v257
      %v260 = vsel %vm168, %v258, 0.0
      %v261 = vsel %vm169, %v259, 0.0
      %v262 = vadd.f32 %v260, %v261
      %263 = vadd.xlane.f32.xlu0 %v262
      %v264 = vpop.xlane.xlu0 %263
      %v265 = vrot.slane %v264, 4
      %v266 = vadd.f32 %v264, %v265
      %v267 = vrot.slane %v266, 2
      %v268 = vadd.f32 %v266, %v267
      %v269 = vrot.slane %v268, 1
      %v270 = vadd.f32 %v268, %v269
      %s271 = vtos %v270
      %v272 = vlaneseq
      %v273 = vand.u32 %v272, 127
      %vm274 = vcmp.eq.s32.totalorder %v273, 0
      %v275 = vstv %s187
      %v276 = vsel %vm274, %v275, 0.0
      %vm277 = vcmp.eq.s32.totalorder %v273, 1
      %v278 = vstv %s197
      %v279 = vsel %vm277, %v278, 0.0
      %v280 = vadd.f32 %v276, %v279
      %vm281 = vcmp.eq.s32.totalorder %v273, 2
      %v282 = vstv %s209
      %v283 = vsel %vm281, %v282, 0.0
      %v284 = vadd.f32 %v280, %v283
      %vm285 = vcmp.eq.s32.totalorder %v273, 3
      %v286 = vstv %s271
      %v287 = vsel %vm285, %v286, 0.0
      %v288 = vadd.f32 %v284, %v287
      %289 = vst [vmem:[%s161] sm:$0xff] %v288
      %p290 = scmp.lt.s32.totalorder %s13, 1
      %s291 = scalar_select %p290, %s13, 1
      %s292 = smul.addr %s291, 8
      %s293 = scalar_lea.vmem %s2, %s292
      // Predicated region
      $region29: #{_lambda_.5} parent=27 // pred_check
        %p294 = pneg %p83
      $region30: #{_lambda_.5} parent=27 // pred_check_branch
        %296 = sbr.rel (%p294) target = $region32
      $region31: #{_lambda_.5} parent=27 // pred_region
        _
      $region32: #{_lambda_.5} parent=27 // pred_fallthru
        _
    $region28: #{_lambda_.5} parent=5 // pred_fallthru
      _
    %p297 = scmp.le.s32.totalorder 2, %s8
    // Predicated region
    $region33: #{_lambda_.5} parent=5 // pred_check
      %p298 = pneg %p297
    $region34: #{_lambda_.5} parent=5 // pred_check_branch
      %300 = sbr.rel (%p298) target = $region36
    $region35: #{_lambda_.5} parent=5 // pred_region
      %s301 = ssub.s32 %s8, 2
      // Predicated region
      $region37: #{_lambda_.5} parent=35 // pred_check
        %p302 = pneg %p89
      $region38: #{_lambda_.5} parent=35 // pred_check_branch
        %304 = sbr.rel (%p302) target = $region40
      $region39: #{_lambda_.5} parent=35 // pred_region
        %p305 = scmp.lt.s32.totalorder %s14, 1
        %s306 = scalar_select %p305, %s14, 1
        %s307 = smul.addr %s306, 8
        %s308 = scalar_lea.vmem %s2, %s307
      $region40: #{_lambda_.5} parent=35 // pred_fallthru
        _
    $region36: #{_lambda_.5} parent=5 // pred_fallthru
      _
  $region6: #{_lambda_.5} parent=0 // loop_footer
    %s12 = sadd.s32 1, %s8
  $region7: #{_lambda_.5} parent=0 // loop_footer_branch
    %7 = sbr.rel target = $region3
  $region8: #{_lambda_.5} parent=0 // loop_exit
    _

// kernel: _lambda_.6
$region0: #{_lambda_.6}
  #allocation0 [shape = 'u32[]', space=smem, size = 0x4, offset = 0x4, fixed_abs, tag = 'smem constant byte address 0x4 - core index']
  #allocation1 [shape = 'u32[144,128]{1,0:T(1,128)}', space=vmem, size = 0x12000, scoped, tag = 'internal scratch']
  %s0 = inlined_call_operand.vmem [shape: f32[2,8,128], index: 0, kind: input, shape index: {}]
  %s1 = inlined_call_operand.vmem [shape: f32[2,8,128], index: 1, kind: input, shape index: {}]
  %s2 = inlined_call_operand.vmem [shape: f32[2,8,128], index: 2, kind: output, shape index: {}]
  %s3 = sld [smem:[#allocation0]]
  $region41: #{_lambda_.6} parent=0
    _
  %s5 = ssub.s32 1, %s3
  %s6 = scalar_select 0, %s5, %s3
  loop: start=0, step=1, limit=4
  $region2: #{_lambda_.6} parent=0 // loop_pre_header
    _
  $region3: #{_lambda_.6} parent=0 // loop_header
    %s8 = sphi 0, %s12
    %p9 = scmp.ge.s32.totalorder %s8, 4
    %s18 = sphi 0, %s20
    %s21 = sphi 0, %s18
    %s22 = sphi 0, %s21
    %s38 = sphi 0, %s22
    %s44 = sphi 0, %s46
    %s47 = sphi 0, %s44
    %s48 = sphi 0, %s47
    %s64 = sphi 0, %s48
    %s70 = sphi 0, %s72
    %s73 = sphi 0, %s70
    %s74 = sphi 0, %s73
    %s90 = sphi 0, %s74
  $region4: #{_lambda_.6} parent=0 // loop_header_branch
    %11 = sbr.rel (%p9) target = $region8
  $region5: #{_lambda_.6} parent=0 // loop_body
    %s13 = ssub.s32 %s8, 1
    %s14 = ssub.s32 %s8, 2
    %s15 = sadd.s32 %s8, 1
    %s16 = ssub.s32 %s8, %s15
    %p17 = scmp.eq.s32.totalorder %s16, 0
    %s19 = sadd.s32 %s18, 1
    %s20 = scalar_select %p17, %s18, %s19
    %p23 = pneg %p17
    %p24 = scmp.eq.s32.totalorder %s8, 1
    %p25 = por %p23, %p24
    %p26 = scmp.ne.s32.totalorder %s18, %s21
    %p27 = scmp.eq.s32.totalorder %s8, 0
    %p28 = por %p26, %p27
    %p29 = scmp.ne.s32.totalorder %s18, %s21
    %p30 = scmp.eq.s32.totalorder %s13, 1
    %p31 = por %p29, %p30
    %p32 = scmp.ne.s32.totalorder %s21, %s22
    %p33 = scmp.eq.s32.totalorder %s13, 0
    %p34 = por %p32, %p33
    %p35 = scmp.ne.s32.totalorder %s21, %s22
    %p36 = scmp.eq.s32.totalorder %s14, 1
    %p37 = por %p35, %p36
    %p39 = scmp.ne.s32.totalorder %s22, %s38
    %p40 = scmp.eq.s32.totalorder %s14, 0
    %p41 = por %p39, %p40
    %s42 = ssub.s32 %s8, %s15
    %p43 = scmp.eq.s32.totalorder %s42, 0
    %s45 = sadd.s32 %s44, 1
    %s46 = scalar_select %p43, %s44, %s45
    %p49 = pneg %p43
    %p50 = scmp.eq.s32.totalorder %s8, 1
    %p51 = por %p49, %p50
    %p52 = scmp.ne.s32.totalorder %s44, %s47
    %p53 = scmp.eq.s32.totalorder %s8, 0
    %p54 = por %p52, %p53
    %p55 = scmp.ne.s32.totalorder %s44, %s47
    %p56 = scmp.eq.s32.totalorder %s13, 1
    %p57 = por %p55, %p56
    %p58 = scmp.ne.s32.totalorder %s47, %s48
    %p59 = scmp.eq.s32.totalorder %s13, 0
    %p60 = por %p58, %p59
    %p61 = scmp.ne.s32.totalorder %s47, %s48
    %p62 = scmp.eq.s32.totalorder %s14, 1
    %p63 = por %p61, %p62
    %p65 = scmp.ne.s32.totalorder %s48, %s64
    %p66 = scmp.eq.s32.totalorder %s14, 0
    %p67 = por %p65, %p66
    %s68 = ssub.s32 %s8, %s15
    %p69 = scmp.eq.s32.totalorder %s68, 0
    %s71 = sadd.s32 %s70, 1
    %s72 = scalar_select %p69, %s70, %s71
    %p75 = pneg %p69
    %p76 = scmp.eq.s32.totalorder %s8, 1
    %p77 = por %p75, %p76
    %p78 = scmp.ne.s32.totalorder %s70, %s73
    %p79 = scmp.eq.s32.totalorder %s8, 0
    %p80 = por %p78, %p79
    %p81 = scmp.ne.s32.totalorder %s70, %s73
    %p82 = scmp.eq.s32.totalorder %s13, 1
    %p83 = por %p81, %p82
    %p84 = scmp.ne.s32.totalorder %s73, %s74
    %p85 = scmp.eq.s32.totalorder %s13, 0
    %p86 = por %p84, %p85
    %p87 = scmp.ne.s32.totalorder %s73, %s74
    %p88 = scmp.eq.s32.totalorder %s14, 1
    %p89 = por %p87, %p88
    %p91 = scmp.ne.s32.totalorder %s74, %s90
    %p92 = scmp.eq.s32.totalorder %s14, 0
    %p93 = por %p91, %p92
    %p94 = scmp.le.s32.totalorder 1, %s8
    %p95 = scmp.lt.s32.totalorder %s8, 3
    %p96 = pnand %p94, %p95
    %p97 = pneg %p96
    // Predicated region
    $region9: #{_lambda_.6} parent=5 // pred_check
      _
    $region10: #{_lambda_.6} parent=5 // pred_check_branch
      %99 = sbr.rel (%p96) target = $region12
    $region11: #{_lambda_.6} parent=5 // pred_region
      %s100 = ssub.s32 %s8, 1
    $region12: #{_lambda_.6} parent=5 // pred_fallthru
      _
    %p101 = scmp.lt.s32.totalorder %s8, 2
    // Predicated region
    $region13: #{_lambda_.6} parent=5 // pred_check
      %p102 = pneg %p101
    $region14: #{_lambda_.6} parent=5 // pred_check_branch
      %104 = sbr.rel (%p102) target = $region16
    $region15: #{_lambda_.6} parent=5 // pred_region
      // Predicated region
      $region17: #{_lambda_.6} parent=15 // pred_check
        %p105 = pneg %p28
      $region18: #{_lambda_.6} parent=15 // pred_check_branch
        %107 = sbr.rel (%p105) target = $region20
      $region19: #{_lambda_.6} parent=15 // pred_region
        %p108 = scmp.lt.s32.totalorder %s8, 1
        %s109 = scalar_select %p108, %s8, 1
        %s110 = smul.addr %s109, 8
        %s111 = scalar_lea.vmem %s0, %s110
      $region20: #{_lambda_.6} parent=15 // pred_fallthru
        _
      // Predicated region
      $region21: #{_lambda_.6} parent=15 // pred_check
        %p112 = pneg %p54
      $region22: #{_lambda_.6} parent=15 // pred_check_branch
        %114 = sbr.rel (%p112) target = $region24
      $region23: #{_lambda_.6} parent=15 // pred_region
        %p115 = scmp.lt.s32.totalorder %s8, 1
        %s116 = scalar_select %p115, %s8, 1
        %s117 = smul.addr %s116, 8
        %s118 = scalar_lea.vmem %s1, %s117
      $region24: #{_lambda_.6} parent=15 // pred_fallthru
        _
    $region16: #{_lambda_.6} parent=5 // pred_fallthru
      _
    %p119 = scmp.le.s32.totalorder 1, %s8
    %p120 = scmp.lt.s32.totalorder %s8, 3
    %p121 = pnand %p119, %p120
    %p122 = pneg %p121
    // Predicated region
    $region25: #{_lambda_.6} parent=5 // pred_check
      _
    $region26: #{_lambda_.6} parent=5 // pred_check_branch
      %124 = sbr.rel (%p121) target = $region28
    $region27: #{_lambda_.6} parent=5 // pred_region
      %s125 = ssub.s32 %s8, 1
      %p126 = scmp.lt.s32.totalorder %s13, 1
      %s127 = scalar_select %p126, %s13, 1
      %s128 = smul.addr %s127, 8
      %s129 = scalar_lea.vmem %s0, %s128
      %p130 = pneg %p34
      %p131 = pneg %p31
      %p132 = scmp.lt.s32.totalorder %s13, 1
      %s133 = scalar_select %p132, %s13, 1
      %s134 = smul.addr %s133, 8
      %s135 = scalar_lea.vmem %s1, %s134
      %p136 = pneg %p60
      %p137 = pneg %p57
      %p138 = pneg %p86
      %p139 = pneg %p83
      %p140 = scmp.lt.s32.totalorder %s13, 1
      %s141 = scalar_select %p140, %s13, 1
      %s142 = smul.addr %s141, 8
      %s143 = scalar_lea.vmem %s2, %s142
      %p144 = scmp.lt.s32.totalorder %s13, 1
      %s145 = scalar_select %p144, %s13, 1
      %s146 = smul.addr %s145, 8
      %s147 = scalar_lea.vmem %s0, %s146
      %p148 = scmp.lt.s32.totalorder %s13, 1
      %s149 = scalar_select %p148, %s13, 1
      %s150 = smul.addr %s149, 8
      %s151 = scalar_lea.vmem %s1, %s150
      %p152 = scmp.lt.s32.totalorder %s13, 1
      %s153 = scalar_select %p152, %s13, 1
      %s154 = smul.addr %s153, 8
      %s155 = scalar_lea.vmem %s2, %s154
      %v156 = vld [vmem:[%s147] sm:$0xff]
      %v157 = vld [vmem:[%s151] sm:$0xff]
      %vm158 = vcmp.ne.f32.partialorder %v157, %v157
      %vm159 = vmxor %vm158, 1
      %v160 = vsub.f32 %v156, %v157
      %v161 = vsel %vm159, %v160, 0.0
      %v162 = vsel %vm159, 1, 0
      %v163 = vcvt.s32.f32 %v162
      %164 = vadd.xlane.f32.xlu0 %v163
      %v165 = vpop.xlane.xlu0 %164
      %v166 = vrot.slane %v165, 4
      %v167 = vadd.f32 %v165, %v166
      %v168 = vrot.slane %v167, 2
      %v169 = vadd.f32 %v167, %v168
      %v170 = vrot.slane %v169, 1
      %v171 = vadd.f32 %v169, %v170
      %s172 = vtos %v171
      %173 = vadd.xlane.f32.xlu0 %v161
      %v174 = vpop.xlane.xlu0 %173
      %v175 = vrot.slane %v174, 4
      %v176 = vadd.f32 %v174, %v175
      %v177 = vrot.slane %v176, 2
      %v178 = vadd.f32 %v176, %v177
      %v179 = vrot.slane %v178, 1
      %v180 = vadd.f32 %v178, %v179
      %s181 = vtos %v180
      %v182 = vmul.f32 %v161, %v161
      %183 = vadd.xlane.f32.xlu0 %v182
      %v184 = vpop.xlane.xlu0 %183
      %v185 = vrot.slane %v184, 4
      %v186 = vadd.f32 %v184, %v185
      %v187 = vrot.slane %v186, 2
      %v188 = vadd.f32 %v186, %v187
      %v189 = vrot.slane %v188, 1
      %v190 = vadd.f32 %v188, %v189
      %s191 = vtos %v190
      %192 = vrot.lane.b32.xlu0 %v161, 1
      %v193 = vpop.permute.xlu0 %192
      %194 = vrot.lane.b32.xlu0 %v161, 127
      %v195 = vpop.permute.xlu0 %194
      %v196 = vsub.f32 %v193, %v195
      %v197 = vmul.f32 %v161, 2.0
      %v198 = vadd.f32 %v193, %v197
      %v199 = vadd.f32 %v198, %v195
      %v200 = vrot.slane %v196, 7
      %v201 = vmul.f32 %v196, 2.0
      %v202 = vadd.f32 %v200, %v201
      %v203 = vrot.slane %v196, 1
      %v204 = vadd.f32 %v202, %v203
      %v205 = vrot.slane %v199, 7
      %v206 = vrot.slane %v199, 1
      %v207 = vsub.f32 %v205, %v206
      %v208 = vand.u32 2147483647, %v204
      %v209 = vand.u32 2147483647, %v207
      %v210 = vadd.f32 %v208, %v209
      %v211 = vsel %vm159, %v210, 0.0
      %212 = vadd.xlane.f32.xlu0 %v211
      %v213 = vpop.xlane.xlu0 %212
      %v214 = vrot.slane %v213, 4
      %v215 = vadd.f32 %v213, %v214
      %v216 = vrot.slane %v215, 2
      %v217 = vadd.f32 %v215, %v216
      %v218 = vrot.slane %v217, 1
      %v219 = vadd.f32 %v217, %v218
      %s220 = vtos %v219
      %v221 = vlaneseq
      %v222 = vand.u32 %v221, 127
      %vm223 = vcmp.eq.s32.totalorder %v222, 0
      %v224 = vstv %s172
      %v225 = vsel %vm223, %v224, 0.0
      %vm226 = vcmp.eq.s32.totalorder %v222, 1
      %v227 = vstv %s181
      %v228 = vsel %vm226, %v227, 0.0
      %v229 = vadd.f32 %v225, %v228
      %vm230 = vcmp.eq.s32.totalorder %v222, 2
      %v231 = vstv %s191
      %v232 = vsel %vm230, %v231, 0.0
      %v233 = vadd.f32 %v229, %v232
      %vm234 = vcmp.eq.s32.totalorder %v222, 3
      %v235 = vstv %s220
      %v236 = vsel %vm234, %v235, 0.0
      %v237 = vadd.f32 %v233, %v236
      %238 = vst [vmem:[%s155] sm:$0xff] %v237
      %p239 = scmp.lt.s32.totalorder %s13, 1
      %s240 = scalar_select %p239, %s13, 1
      %s241 = smul.addr %s240, 8
      %s242 = scalar_lea.vmem %s2, %s241
      // Predicated region
      $region29: #{_lambda_.6} parent=27 // pred_check
        %p243 = pneg %p83
      $region30: #{_lambda_.6} parent=27 // pred_check_branch
        %245 = sbr.rel (%p243) target = $region32
      $region31: #{_lambda_.6} parent=27 // pred_region
        _
      $region32: #{_lambda_.6} parent=27 // pred_fallthru
        _
    $region28: #{_lambda_.6} parent=5 // pred_fallthru
      _
    %p246 = scmp.le.s32.totalorder 2, %s8
    // Predicated region
    $region33: #{_lambda_.6} parent=5 // pred_check
      %p247 = pneg %p246
    $region34: #{_lambda_.6} parent=5 // pred_check_branch
      %249 = sbr.rel (%p247) target = $region36
    $region35: #{_lambda_.6} parent=5 // pred_region
      %s250 = ssub.s32 %s8, 2
      // Predicated region
      $region37: #{_lambda_.6} parent=35 // pred_check
        %p251 = pneg %p89
      $region38: #{_lambda_.6} parent=35 // pred_check_branch
        %253 = sbr.rel (%p251) target = $region40
      $region39: #{_lambda_.6} parent=35 // pred_region
        %p254 = scmp.lt.s32.totalorder %s14, 1
        %s255 = scalar_select %p254, %s14, 1
        %s256 = smul.addr %s255, 8
        %s257 = scalar_lea.vmem %s2, %s256
      $region40: #{_lambda_.6} parent=35 // pred_fallthru
        _
    $region36: #{_lambda_.6} parent=5 // pred_fallthru
      _
  $region6: #{_lambda_.6} parent=0 // loop_footer
    %s12 = sadd.s32 1, %s8
  $region7: #{_lambda_.6} parent=0 // loop_footer_branch
    %7 = sbr.rel target = $region3
  $region8: #{_lambda_.6} parent=0 // loop_exit
    _

</llo_original>
